<compile_context>
chip_gen: v7x
topology: tpu7x:2x2x1
jax: 0.10.0
libtpu: 0.0.40
codegen_flags: <defaults>
</compile_context>

<pallas_src>
import math

import jax
import jax.numpy as jnp
from jax.experimental import pallas as pl
from jax.experimental.pallas import tpu as pltpu

_LANE = 128


def _cdiv(a, b):
    return -(-a // b)


def _round_up(v, m):
    return _cdiv(v, m) * m


def _sublane(itemsize):
    # f32 -> 8, bf16 -> 16, int8 -> 32 (sub-32-bit dtypes pack along sublanes).
    return max(8, 32 // itemsize)


def _chip_params():
    """(vmem_limit_bytes, target_step_bytes) per TPU generation."""
    cap = 128 * 1024 * 1024
    try:
        cap = int(getattr(pltpu.get_tpu_info(), "vmem_capacity_bytes", cap))
    except Exception:
        pass
    if cap <= 96 * 1024 * 1024:
        # v7x-class: 64 MiB physical VMEM per TC -> keep scoped limit <= ~40 MiB,
        # but bias per-step bytes up because HBM is ~3.2 TB/s.
        return 40 * 1024 * 1024, 4 * 1024 * 1024
    # v5e / v6e: 128 MiB physical VMEM.
    return 64 * 1024 * 1024, 2 * 1024 * 1024


def _max_tile(itemsize):
    """Largest 128-multiple tile side targeting ~4 MiB per block (dtype aware)."""
    side = int((4 * 1024 * 1024 // itemsize) ** 0.5)
    return max(512, min(2048, (side // _LANE) * _LANE))


def _pick_tile(dim, max_tile):
    """Tile size along one trailing dim.

    If the dim fits a single tile, use the full dim (one block, no masking,
    the "equals full array dim" escape from the (8,128) rule).  Otherwise use
    a balanced multiple of 128; the last, partial tile is masked by Pallas.
    """
    if dim <= max_tile:
        return dim
    n_tiles = _cdiv(dim, max_tile)
    return min(max_tile, _round_up(_cdiv(dim, n_tiles), _LANE))


def _transpose_kernel(x_ref, o_ref):
    # 2-D block (tiled path, leading dim squeezed) -> direct XLU transpose;
    # 3-D block (packed path) -> batched transpose of the two trailing dims.
    o_ref[...] = jnp.swapaxes(x_ref[...], -2, -1)


def _transpose_tiled(x3, max_tile, vmem_limit):
    """x3: (B, M, N) with a plane too large for one tile -> (B, N, M)."""
    B, M, N = x3.shape
    itemsize = x3.dtype.itemsize
    tm = _pick_tile(M, max_tile)
    tn = _pick_tile(N, max_tile)
    gm = _cdiv(M, tm)
    gn = _cdiv(N, tn)

    # Order grid axes by decreasing extent so the leading "parallel" axis
    # (the one v7x megacore shards) has extent >= 2 whenever possible.
    axes = sorted((("b", B), ("i", gm), ("j", gn)), key=lambda kv: -kv[1])
    order = tuple(k for k, _ in axes)
    grid = tuple(v for _, v in axes)

    def _imap(transposed):
        def imap(*gidx):
            d = dict(zip(order, gidx))
            if transposed:
                return (d["b"], d["j"], d["i"])
            return (d["b"], d["i"], d["j"])
        return imap

    return pl.pallas_call(
        _transpose_kernel,
        out_shape=jax.ShapeDtypeStruct((B, N, M), x3.dtype),
        grid=grid,
        in_specs=[pl.BlockSpec((None, tm, tn), _imap(False))],
        out_specs=pl.BlockSpec((None, tn, tm), _imap(True)),
        compiler_params=pltpu.CompilerParams(
            dimension_semantics=("parallel", "parallel", "parallel"),
            vmem_limit_bytes=vmem_limit,
        ),
        cost_estimate=pl.CostEstimate(
            flops=0,
            transcendentals=0,
            bytes_accessed=2 * B * M * N * itemsize,
        ),
    )(x3)


def _transpose_packed(x3, vmem_limit, target_step_bytes):
    """x3: (B, M, N) with a plane that fits one tile -> (B, N, M), several planes per step."""
    B, M, N = x3.shape
    itemsize = x3.dtype.itemsize
    sub = _sublane(itemsize)

    # VMEM footprint of one plane, with lane (128) / sublane padding applied
    # (NOT dense bytes — a narrow N pads out to 128 lanes in VMEM).
    in_plane_vmem = _round_up(M, sub) * _round_up(N, _LANE) * itemsize
    out_plane_vmem = _round_up(N, sub) * _round_up(M, _LANE) * itemsize
    per_plane_vmem = 2 * (in_plane_vmem + out_plane_vmem)  # double-buffered in + out
    tb_vmem = max(1, (vmem_limit // 2) // per_plane_vmem)  # leave headroom for Mosaic scratch

    dense_plane = M * N * itemsize
    tb_bw = max(1, target_step_bytes // max(1, dense_plane))

    tb_cap = int(min(B, tb_bw, tb_vmem))
    # Pick the largest batch block <= tb_cap that divides B exactly, so the
    # leading dim never needs masked edge blocks (tb_cap is small, loop is cheap).
    tb = 1
    for t in range(tb_cap, 0, -1):
        if B % t == 0:
            tb = t
            break
    gb = B // tb

    return pl.pallas_call(
        _transpose_kernel,
        out_shape=jax.ShapeDtypeStruct((B, N, M), x3.dtype),
        grid=(gb,),
        # Trailing block dims equal the full array dims -> (8,128) rule satisfied.
        in_specs=[pl.BlockSpec((tb, M, N), lambda b: (b, 0, 0))],
        out_specs=pl.BlockSpec((tb, N, M), lambda b: (b, 0, 0)),
        compiler_params=pltpu.CompilerParams(
            dimension_semantics=("parallel",),
            vmem_limit_bytes=vmem_limit,
        ),
        cost_estimate=pl.CostEstimate(
            flops=0,
            transcendentals=0,
            bytes_accessed=2 * B * M * N * itemsize,
        ),
    )(x3)


def transpose_last(x, deconstruct_idx=None):
    """JAX/Pallas equivalent of TransposeLast.forward: x.transpose(-2, -1)."""
    if deconstruct_idx is not None:
        # Glue: optional deconstruction indexing, done in plain JAX.
        x = x[deconstruct_idx]
    x = jnp.asarray(x)
    if x.ndim < 2:
        raise ValueError("TransposeLast requires at least 2 dims")

    lead = x.shape[:-2]
    M, N = x.shape[-2], x.shape[-1]

    # Tiny / lane-sparse planes (output last dim < 128 would make every store
    # a masked partial vst): let XLA handle/fuse them — it is free there.
    if x.size == 0 or min(M, N) < _LANE:
        return jnp.swapaxes(x, -2, -1)

    B = math.prod(lead) if lead else 1
    x3 = x.reshape((B, M, N))

    itemsize = x.dtype.itemsize
    max_tile = _max_tile(itemsize)
    vmem_limit, target_step_bytes = _chip_params()

    if _round_up(M, _LANE) <= max_tile and _round_up(N, _LANE) <= max_tile:
        out = _transpose_packed(x3, vmem_limit, target_step_bytes)
    else:
        out = _transpose_tiled(x3, max_tile, vmem_limit)

    return out.reshape(lead + (N, M))


if __name__ == "__main__":
    key = jax.random.PRNGKey(0)
    k1, k2, k3, k4 = jax.random.split(key, 4)

    # 1) Small NCHW-style input (batch=2, channels=4, 16x16): lane-sparse plane
    #    -> XLA fallback path (per review: don't run a masked-vst Pallas path).
    x = jax.random.normal(k1, (2, 4, 16, 16), dtype=jnp.float32)
    y = transpose_last(x)
    jax.block_until_ready(y)
    assert y.shape == (2, 4, 16, 16), y.shape
    assert jnp.array_equal(y, jnp.swapaxes(x, -2, -1)), "small-plane path mismatch"

    # 2) deconstruct_idx glue path.
    y_idx = transpose_last(x, deconstruct_idx=0)
    jax.block_until_ready(y_idx)
    assert jnp.array_equal(y_idx, jnp.swapaxes(x[0], -2, -1)), "deconstruct_idx mismatch"

    # 3) Medium, lane-dense planes -> packed Pallas path (multiple planes per
    #    grid step, B=4 -> tb=2, gb=2 on v5e/v6e).
    x_pk = jax.random.normal(k2, (4, 384, 520), dtype=jnp.float32)
    y_pk = transpose_last(x_pk)
    jax.block_until_ready(y_pk)
    assert y_pk.shape == (4, 520, 384), y_pk.shape
    assert jnp.array_equal(y_pk, jnp.swapaxes(x_pk, -2, -1)), "packed f32 path mismatch"

    # 4) bf16 packed path (dtype-aware sublane/lane VMEM sizing).
    x_bf = jax.random.normal(k3, (3, 200, 256), dtype=jnp.bfloat16)
    y_bf = transpose_last(x_bf)
    jax.block_until_ready(y_bf)
    assert y_bf.shape == (3, 256, 200), y_bf.shape
    assert jnp.array_equal(y_bf, jnp.swapaxes(x_bf, -2, -1)), "packed bf16 path mismatch"

    # 5) 2-D input with a dim larger than one tile and not a multiple of the
    #    tile -> tiled Pallas path with in-kernel masked ragged edge blocks
    #    (no wrapper pad/slice round trips).
    x_big = jax.random.normal(k4, (1100, 384), dtype=jnp.float32)
    y_big = transpose_last(x_big)
    jax.block_until_ready(y_big)
    assert y_big.shape == (384, 1100), y_big.shape
    assert jnp.array_equal(y_big, x_big.T), "tiled ragged-edge path mismatch"

    print("KERNEL_OK")
</pallas_src>

<mosaic_0001>
module attributes {stable_mosaic.version = 11 : i64} {
  func.func @_transpose_kernel(%arg0: i32, %arg1: memref<2x384x520xf32, #tpu.memory_space<vmem>>, %arg2: memref<2x520x384xf32, #tpu.memory_space<vmem>>) attributes {dimension_semantics = [#tpu.dimension_semantics<parallel>], iteration_bounds = array<i64: 2>, scalar_prefetch = 0 : i64, scratch_operands = 0 : i64, tpu.core_type = #tpu.core_type<tc>, window_params = [{transform_indices = @transform_0, window_bounds = array<i64: 2, 384, 520>}, {transform_indices = @transform_1, window_bounds = array<i64: 2, 520, 384>}]} {
    %c0 = arith.constant 0 : index
    %c0_0 = arith.constant 0 : index
    %c0_1 = arith.constant 0 : index
    %0 = vector.load %arg1[%c0, %c0_0, %c0_1] : memref<2x384x520xf32, #tpu.memory_space<vmem>>, vector<2x384x520xf32>
    %1 = tpu.transpose %0, [0, 2, 1] : vector<2x384x520xf32> -> vector<2x520x384xf32>
    %c0_2 = arith.constant 0 : index
    %c0_3 = arith.constant 0 : index
    %c0_4 = arith.constant 0 : index
    %2 = vector.load %arg2[%c0_2, %c0_3, %c0_4] : memref<2x520x384xf32, #tpu.memory_space<vmem>>, vector<2x520x384xf32>
    tpu.vector_store %arg2[%c0_2, %c0_3, %c0_4], %1 {strides = array<i32>} : memref<2x520x384xf32, #tpu.memory_space<vmem>>, vector<2x520x384xf32>,
    return
  }
  func.func @transform_0(%arg0: i32) -> (i32, i32, i32) {
    %c0_i32 = arith.constant 0 : i32
    %c0_i32_0 = arith.constant 0 : i32
    %c0_i32_1 = arith.constant 0 : i32
    return %arg0, %c0_i32, %c0_i32_0 : i32, i32, i32
  }
  func.func @transform_1(%arg0: i32) -> (i32, i32, i32) {
    %c0_i32 = arith.constant 0 : i32
    %c0_i32_0 = arith.constant 0 : i32
    %c0_i32_1 = arith.constant 0 : i32
    return %arg0, %c0_i32, %c0_i32_0 : i32, i32, i32
  }
}

</mosaic_0001>

<llo_original>
// kernel: tpu_custom_call.1
$region0: #{tpu_custom_call.1}
  #allocation0 [shape = 'u32[]', space=smem, size = 0x4, offset = 0x4, fixed_abs, tag = 'smem constant byte address 0x4 - core index']
  #allocation1 [shape = 'u32[144,128]{1,0:T(1,128)}', space=vmem, size = 0x12000, scoped, tag = 'internal scratch']
  %s0 = inlined_call_operand.hbm [shape: f32[4,384,520], index: 0, kind: input, shape index: {}]
  %s1 = inlined_call_operand.hbm [shape: f32[4,520,384], index: 1, kind: output, shape index: {}]
  %s2 = sld [smem:[#allocation0]]
  $region41: #{tpu_custom_call.1} parent=0
    _
  %s4 = ssub.s32 1, %s2
  %s5 = scalar_select 0, %s4, %s2
  $region1: #{tpu_custom_call.1} parent=0
    #allocation2 [shape = 'u8[3932160]{0}', space=vmem, size = 0x3c0000, scoped, tag = 'input window, operand 0']
    #allocation3 [shape = 's32[2]{0}', space=sflag, size = 0x8, scoped, tag = 'scoped memory for tpu_custom_call.1']
    #allocation4 [shape = 's32[2]{0}', space=sflag, size = 0x8, scoped, tag = 'scoped memory for tpu_custom_call.1']
    #allocation5 [shape = 'u8[3194880]{0}', space=vmem, size = 0x30c000, scoped, tag = 'output window, operand 0']
    %6 = vsyncpa [#allocation3], 0
    %s7 = scalar_lea.sflag [#allocation3], 1
    %8 = vsyncpa %s7, 0
    %9 = vsyncpa [#allocation4], 0
    %s10 = scalar_lea.sflag [#allocation4], 1
    %11 = vsyncpa %s10, 0
    loop: start=0, step=1, limit=4
    $region2: #{tpu_custom_call.1} parent=1 // loop_pre_header
      _
    $region3: #{tpu_custom_call.1} parent=1 // loop_header
      %s13 = sphi 0, %s17
      %p14 = scmp.ge.s32.totalorder %s13, 4
      %s23 = sphi 0, %s25
      %s26 = sphi 0, %s23
      %s27 = sphi 0, %s26
      %s43 = sphi 0, %s27
      %s49 = sphi 0, %s51
      %s52 = sphi 0, %s49
      %s53 = sphi 0, %s52
      %s69 = sphi 0, %s53
    $region4: #{tpu_custom_call.1} parent=1 // loop_header_branch
      %16 = sbr.rel (%p14) target = $region8
    $region5: #{tpu_custom_call.1} parent=1 // loop_body
      %s18 = ssub.s32 %s13, 1
      %s19 = ssub.s32 %s13, 2
      %s20 = sadd.s32 %s13, 1
      %s21 = ssub.s32 %s13, %s20
      %p22 = scmp.eq.s32.totalorder %s21, 0
      %s24 = sadd.s32 %s23, 1
      %s25 = scalar_select %p22, %s23, %s24
      %p28 = pneg %p22
      %p29 = scmp.eq.s32.totalorder %s13, 1
      %p30 = por %p28, %p29
      %p31 = scmp.ne.s32.totalorder %s23, %s26
      %p32 = scmp.eq.s32.totalorder %s13, 0
      %p33 = por %p31, %p32
      %p34 = scmp.ne.s32.totalorder %s23, %s26
      %p35 = scmp.eq.s32.totalorder %s18, 1
      %p36 = por %p34, %p35
      %p37 = scmp.ne.s32.totalorder %s26, %s27
      %p38 = scmp.eq.s32.totalorder %s18, 0
      %p39 = por %p37, %p38
      %p40 = scmp.ne.s32.totalorder %s26, %s27
      %p41 = scmp.eq.s32.totalorder %s19, 1
      %p42 = por %p40, %p41
      %p44 = scmp.ne.s32.totalorder %s27, %s43
      %p45 = scmp.eq.s32.totalorder %s19, 0
      %p46 = por %p44, %p45
      %s47 = ssub.s32 %s13, %s20
      %p48 = scmp.eq.s32.totalorder %s47, 0
      %s50 = sadd.s32 %s49, 1
      %s51 = scalar_select %p48, %s49, %s50
      %p54 = pneg %p48
      %p55 = scmp.eq.s32.totalorder %s13, 1
      %p56 = por %p54, %p55
      %p57 = scmp.ne.s32.totalorder %s49, %s52
      %p58 = scmp.eq.s32.totalorder %s13, 0
      %p59 = por %p57, %p58
      %p60 = scmp.ne.s32.totalorder %s49, %s52
      %p61 = scmp.eq.s32.totalorder %s18, 1
      %p62 = por %p60, %p61
      %p63 = scmp.ne.s32.totalorder %s52, %s53
      %p64 = scmp.eq.s32.totalorder %s18, 0
      %p65 = por %p63, %p64
      %p66 = scmp.ne.s32.totalorder %s52, %s53
      %p67 = scmp.eq.s32.totalorder %s19, 1
      %p68 = por %p66, %p67
      %p70 = scmp.ne.s32.totalorder %s53, %s69
      %p71 = scmp.eq.s32.totalorder %s19, 0
      %p72 = por %p70, %p71
      %p73 = scmp.le.s32.totalorder 1, %s13
      %p74 = scmp.lt.s32.totalorder %s13, 3
      %p75 = pnand %p73, %p74
      %p76 = pneg %p75
      // Predicated region
      $region9: #{tpu_custom_call.1} parent=5 // pred_check
        _
      $region10: #{tpu_custom_call.1} parent=5 // pred_check_branch
        %78 = sbr.rel (%p75) target = $region12
      $region11: #{tpu_custom_call.1} parent=5 // pred_region
        %s79 = ssub.s32 %s13, 1
      $region12: #{tpu_custom_call.1} parent=5 // pred_fallthru
        _
      %p80 = scmp.lt.s32.totalorder %s13, 2
      // Predicated region
      $region13: #{tpu_custom_call.1} parent=5 // pred_check
        %p81 = pneg %p80
      $region14: #{tpu_custom_call.1} parent=5 // pred_check_branch
        %83 = sbr.rel (%p81) target = $region16
      $region15: #{tpu_custom_call.1} parent=5 // pred_region
        // Predicated region
        $region17: #{tpu_custom_call.1} parent=15 // pred_check
          %p84 = pneg %p33
        $region18: #{tpu_custom_call.1} parent=15 // pred_check_branch
          %86 = sbr.rel (%p84) target = $region20
        $region19: #{tpu_custom_call.1} parent=15 // pred_region
          %s87 = sand.u32 %s23, 1
          %s88 = scalar_lea.sflag [#allocation3], %s87
          %s89 = sand.u32 %s23, 1
          %s90 = smul.addr %s89, 3840
          %s91 = scalar_lea.vmem [#allocation2], %s90
          %s92 = smul.u32 2, %s13
          %s94 = ssub.s32 61440, 61440
          %95 = vsyncadd %s88, %s94
          %s96 = smul.addr %s92, 240
          %s97 = smul.addr %s96, 128
          %s98 = scalar_lea.hbm %s0, %s97
          %s99 = sshll.u32 %s91, 4
          %s100 = int_to_ptr.vmem [resolvable:$true] %s99
          %105 = dma.hbm_to_vmem [thread:$0]  %s98, 61440, %s100, %s88, 640, 640, 40
        $region20: #{tpu_custom_call.1} parent=15 // pred_fallthru
          _
      $region16: #{tpu_custom_call.1} parent=5 // pred_fallthru
        _
      %p106 = scmp.le.s32.totalorder 1, %s13
      %p107 = scmp.lt.s32.totalorder %s13, 3
      %p108 = pnand %p106, %p107
      %p109 = pneg %p108
      // Predicated region
      $region21: #{tpu_custom_call.1} parent=5 // pred_check
        _
      $region22: #{tpu_custom_call.1} parent=5 // pred_check_branch
        %111 = sbr.rel (%p108) target = $region24
      $region23: #{tpu_custom_call.1} parent=5 // pred_region
        %s112 = ssub.s32 %s13, 1
        %s113 = sand.u32 %s26, 1
        %s114 = scalar_lea.sflag [#allocation3], %s113
        %s115 = sand.u32 %s26, 1
        %s116 = smul.addr %s115, 3840
        %s117 = scalar_lea.vmem [#allocation2], %s116
        // Predicated region
        $region25: #{tpu_custom_call.1} parent=23 // pred_check
          %p118 = pneg %p39
        $region26: #{tpu_custom_call.1} parent=23 // pred_check_branch
          %120 = sbr.rel (%p118) target = $region28
        $region27: #{tpu_custom_call.1} parent=23 // pred_region
          %121 = dma.done %s114, 61440
        $region28: #{tpu_custom_call.1} parent=23 // pred_fallthru
          _
        %s122 = sand.u32 %s26, 1
        %s123 = scalar_lea.sflag [#allocation3], %s122
        %s124 = sand.u32 %s26, 1
        %s125 = smul.addr %s124, 3840
        %s126 = scalar_lea.vmem [#allocation2], %s125
        %p127 = pneg %p39
        %p128 = pneg %p36
        %p129 = pneg %p65
        %p130 = pneg %p62
        %s131 = sand.u32 %s52, 1
        %s132 = scalar_lea.sflag [#allocation4], %s131
        %s133 = sand.u32 %s52, 1
        %s134 = smul.addr %s133, 3120
        %s135 = scalar_lea.vmem [#allocation5], %s134
        %s136 = smul.u32 2, %s18
        %s137 = smul.u32 2, %s18
        %v138 = vld [vmem:[%s117] sm:$0xff]
        %v139 = vld [vmem:[%s117 + $0x8] sm:$0xff]
        %v140 = vld [vmem:[%s117 + $0x10] sm:$0xff]
        %v141 = vld [vmem:[%s117 + $0x18] sm:$0xff]
        %v142 = vld [vmem:[%s117 + $0x20] sm:$0xff]
        %v143 = vld [vmem:[%s117 + $0x28] sm:$0xff]
        %v144 = vld [vmem:[%s117 + $0x30] sm:$0xff]
        %v145 = vld [vmem:[%s117 + $0x38] sm:$0xff]
        %v146 = vld [vmem:[%s117 + $0x40] sm:$0xff]
        %v147 = vld [vmem:[%s117 + $0x48] sm:$0xff]
        %v148 = vld [vmem:[%s117 + $0x50] sm:$0xff]
        %v149 = vld [vmem:[%s117 + $0x58] sm:$0xff]
        %v150 = vld [vmem:[%s117 + $0x60] sm:$0xff]
        %v151 = vld [vmem:[%s117 + $0x68] sm:$0xff]
        %v152 = vld [vmem:[%s117 + $0x70] sm:$0xff]
        %v153 = vld [vmem:[%s117 + $0x78] sm:$0xff]
        %v154 = vld [vmem:[%s117 + $0x80] sm:$0xff]
        %v155 = vld [vmem:[%s117 + $0x88] sm:$0xff]
        %v156 = vld [vmem:[%s117 + $0x90] sm:$0xff]
        %v157 = vld [vmem:[%s117 + $0x98] sm:$0xff]
        %v158 = vld [vmem:[%s117 + $0xa0] sm:$0xff]
        %v159 = vld [vmem:[%s117 + $0xa8] sm:$0xff]
        %v160 = vld [vmem:[%s117 + $0xb0] sm:$0xff]
        %v161 = vld [vmem:[%s117 + $0xb8] sm:$0xff]
        %v162 = vld [vmem:[%s117 + $0xc0] sm:$0xff]
        %v163 = vld [vmem:[%s117 + $0xc8] sm:$0xff]
        %v164 = vld [vmem:[%s117 + $0xd0] sm:$0xff]
        %v165 = vld [vmem:[%s117 + $0xd8] sm:$0xff]
        %v166 = vld [vmem:[%s117 + $0xe0] sm:$0xff]
        %v167 = vld [vmem:[%s117 + $0xe8] sm:$0xff]
        %v168 = vld [vmem:[%s117 + $0xf0] sm:$0xff]
        %v169 = vld [vmem:[%s117 + $0xf8] sm:$0xff]
        %v170 = vld [vmem:[%s117 + $0x100] sm:$0xff]
        %v171 = vld [vmem:[%s117 + $0x108] sm:$0xff]
        %v172 = vld [vmem:[%s117 + $0x110] sm:$0xff]
        %v173 = vld [vmem:[%s117 + $0x118] sm:$0xff]
        %v174 = vld [vmem:[%s117 + $0x120] sm:$0xff]
        %v175 = vld [vmem:[%s117 + $0x128] sm:$0xff]
        %v176 = vld [vmem:[%s117 + $0x130] sm:$0xff]
        %v177 = vld [vmem:[%s117 + $0x138] sm:$0xff]
        %v178 = vld [vmem:[%s117 + $0x140] sm:$0xff]
        %v179 = vld [vmem:[%s117 + $0x148] sm:$0xff]
        %v180 = vld [vmem:[%s117 + $0x150] sm:$0xff]
        %v181 = vld [vmem:[%s117 + $0x158] sm:$0xff]
        %v182 = vld [vmem:[%s117 + $0x160] sm:$0xff]
        %v183 = vld [vmem:[%s117 + $0x168] sm:$0xff]
        %v184 = vld [vmem:[%s117 + $0x170] sm:$0xff]
        %v185 = vld [vmem:[%s117 + $0x178] sm:$0xff]
        %v186 = vld [vmem:[%s117 + $0x180] sm:$0xff]
        %v187 = vld [vmem:[%s117 + $0x188] sm:$0xff]
        %v188 = vld [vmem:[%s117 + $0x190] sm:$0xff]
        %v189 = vld [vmem:[%s117 + $0x198] sm:$0xff]
        %v190 = vld [vmem:[%s117 + $0x1a0] sm:$0xff]
        %v191 = vld [vmem:[%s117 + $0x1a8] sm:$0xff]
        %v192 = vld [vmem:[%s117 + $0x1b0] sm:$0xff]
        %v193 = vld [vmem:[%s117 + $0x1b8] sm:$0xff]
        %v194 = vld [vmem:[%s117 + $0x1c0] sm:$0xff]
        %v195 = vld [vmem:[%s117 + $0x1c8] sm:$0xff]
        %v196 = vld [vmem:[%s117 + $0x1d0] sm:$0xff]
        %v197 = vld [vmem:[%s117 + $0x1d8] sm:$0xff]
        %v198 = vld [vmem:[%s117 + $0x1e0] sm:$0xff]
        %v199 = vld [vmem:[%s117 + $0x1e8] sm:$0xff]
        %v200 = vld [vmem:[%s117 + $0x1f0] sm:$0xff]
        %v201 = vld [vmem:[%s117 + $0x1f8] sm:$0xff]
        %v202 = vld [vmem:[%s117 + $0x200] sm:$0xff]
        %v203 = vld [vmem:[%s117 + $0x208] sm:$0xff]
        %v204 = vld [vmem:[%s117 + $0x210] sm:$0xff]
        %v205 = vld [vmem:[%s117 + $0x218] sm:$0xff]
        %v206 = vld [vmem:[%s117 + $0x220] sm:$0xff]
        %v207 = vld [vmem:[%s117 + $0x228] sm:$0xff]
        %v208 = vld [vmem:[%s117 + $0x230] sm:$0xff]
        %v209 = vld [vmem:[%s117 + $0x238] sm:$0xff]
        %v210 = vld [vmem:[%s117 + $0x240] sm:$0xff]
        %v211 = vld [vmem:[%s117 + $0x248] sm:$0xff]
        %v212 = vld [vmem:[%s117 + $0x250] sm:$0xff]
        %v213 = vld [vmem:[%s117 + $0x258] sm:$0xff]
        %v214 = vld [vmem:[%s117 + $0x260] sm:$0xff]
        %v215 = vld [vmem:[%s117 + $0x268] sm:$0xff]
        %v216 = vld [vmem:[%s117 + $0x270] sm:$0xff]
        %v217 = vld [vmem:[%s117 + $0x278] sm:$0xff]
        %v218 = vld [vmem:[%s117 + $0x280] sm:$0xff]
        %v219 = vld [vmem:[%s117 + $0x288] sm:$0xff]
        %v220 = vld [vmem:[%s117 + $0x290] sm:$0xff]
        %v221 = vld [vmem:[%s117 + $0x298] sm:$0xff]
        %v222 = vld [vmem:[%s117 + $0x2a0] sm:$0xff]
        %v223 = vld [vmem:[%s117 + $0x2a8] sm:$0xff]
        %v224 = vld [vmem:[%s117 + $0x2b0] sm:$0xff]
        %v225 = vld [vmem:[%s117 + $0x2b8] sm:$0xff]
        %v226 = vld [vmem:[%s117 + $0x2c0] sm:$0xff]
        %v227 = vld [vmem:[%s117 + $0x2c8] sm:$0xff]
        %v228 = vld [vmem:[%s117 + $0x2d0] sm:$0xff]
        %v229 = vld [vmem:[%s117 + $0x2d8] sm:$0xff]
        %v230 = vld [vmem:[%s117 + $0x2e0] sm:$0xff]
        %v231 = vld [vmem:[%s117 + $0x2e8] sm:$0xff]
        %v232 = vld [vmem:[%s117 + $0x2f0] sm:$0xff]
        %v233 = vld [vmem:[%s117 + $0x2f8] sm:$0xff]
        %v234 = vld [vmem:[%s117 + $0x300] sm:$0xff]
        %v235 = vld [vmem:[%s117 + $0x308] sm:$0xff]
        %v236 = vld [vmem:[%s117 + $0x310] sm:$0xff]
        %v237 = vld [vmem:[%s117 + $0x318] sm:$0xff]
        %v238 = vld [vmem:[%s117 + $0x320] sm:$0xff]
        %v239 = vld [vmem:[%s117 + $0x328] sm:$0xff]
        %v240 = vld [vmem:[%s117 + $0x330] sm:$0xff]
        %v241 = vld [vmem:[%s117 + $0x338] sm:$0xff]
        %v242 = vld [vmem:[%s117 + $0x340] sm:$0xff]
        %v243 = vld [vmem:[%s117 + $0x348] sm:$0xff]
        %v244 = vld [vmem:[%s117 + $0x350] sm:$0xff]
        %v245 = vld [vmem:[%s117 + $0x358] sm:$0xff]
        %v246 = vld [vmem:[%s117 + $0x360] sm:$0xff]
        %v247 = vld [vmem:[%s117 + $0x368] sm:$0xff]
        %v248 = vld [vmem:[%s117 + $0x370] sm:$0xff]
        %v249 = vld [vmem:[%s117 + $0x378] sm:$0xff]
        %v250 = vld [vmem:[%s117 + $0x380] sm:$0xff]
        %v251 = vld [vmem:[%s117 + $0x388] sm:$0xff]
        %v252 = vld [vmem:[%s117 + $0x390] sm:$0xff]
        %v253 = vld [vmem:[%s117 + $0x398] sm:$0xff]
        %v254 = vld [vmem:[%s117 + $0x3a0] sm:$0xff]
        %v255 = vld [vmem:[%s117 + $0x3a8] sm:$0xff]
        %v256 = vld [vmem:[%s117 + $0x3b0] sm:$0xff]
        %v257 = vld [vmem:[%s117 + $0x3b8] sm:$0xff]
        %v258 = vld [vmem:[%s117 + $0x3c0] sm:$0xff]
        %v259 = vld [vmem:[%s117 + $0x3c8] sm:$0xff]
        %v260 = vld [vmem:[%s117 + $0x3d0] sm:$0xff]
        %v261 = vld [vmem:[%s117 + $0x3d8] sm:$0xff]
        %v262 = vld [vmem:[%s117 + $0x3e0] sm:$0xff]
        %v263 = vld [vmem:[%s117 + $0x3e8] sm:$0xff]
        %v264 = vld [vmem:[%s117 + $0x3f0] sm:$0xff]
        %v265 = vld [vmem:[%s117 + $0x3f8] sm:$0xff]
        %v266 = vld [vmem:[%s117 + $0x400] sm:$0xff]
        %v267 = vld [vmem:[%s117 + $0x408] sm:$0xff]
        %v268 = vld [vmem:[%s117 + $0x410] sm:$0xff]
        %v269 = vld [vmem:[%s117 + $0x418] sm:$0xff]
        %v270 = vld [vmem:[%s117 + $0x420] sm:$0xff]
        %v271 = vld [vmem:[%s117 + $0x428] sm:$0xff]
        %v272 = vld [vmem:[%s117 + $0x430] sm:$0xff]
        %v273 = vld [vmem:[%s117 + $0x438] sm:$0xff]
        %v274 = vld [vmem:[%s117 + $0x440] sm:$0xff]
        %v275 = vld [vmem:[%s117 + $0x448] sm:$0xff]
        %v276 = vld [vmem:[%s117 + $0x450] sm:$0xff]
        %v277 = vld [vmem:[%s117 + $0x458] sm:$0xff]
        %v278 = vld [vmem:[%s117 + $0x460] sm:$0xff]
        %v279 = vld [vmem:[%s117 + $0x468] sm:$0xff]
        %v280 = vld [vmem:[%s117 + $0x470] sm:$0xff]
        %v281 = vld [vmem:[%s117 + $0x478] sm:$0xff]
        %v282 = vld [vmem:[%s117 + $0x480] sm:$0xff]
        %v283 = vld [vmem:[%s117 + $0x488] sm:$0xff]
        %v284 = vld [vmem:[%s117 + $0x490] sm:$0xff]
        %v285 = vld [vmem:[%s117 + $0x498] sm:$0xff]
        %v286 = vld [vmem:[%s117 + $0x4a0] sm:$0xff]
        %v287 = vld [vmem:[%s117 + $0x4a8] sm:$0xff]
        %v288 = vld [vmem:[%s117 + $0x4b0] sm:$0xff]
        %v289 = vld [vmem:[%s117 + $0x4b8] sm:$0xff]
        %v290 = vld [vmem:[%s117 + $0x4c0] sm:$0xff]
        %v291 = vld [vmem:[%s117 + $0x4c8] sm:$0xff]
        %v292 = vld [vmem:[%s117 + $0x4d0] sm:$0xff]
        %v293 = vld [vmem:[%s117 + $0x4d8] sm:$0xff]
        %v294 = vld [vmem:[%s117 + $0x4e0] sm:$0xff]
        %v295 = vld [vmem:[%s117 + $0x4e8] sm:$0xff]
        %v296 = vld [vmem:[%s117 + $0x4f0] sm:$0xff]
        %v297 = vld [vmem:[%s117 + $0x4f8] sm:$0xff]
        %v298 = vld [vmem:[%s117 + $0x500] sm:$0xff]
        %v299 = vld [vmem:[%s117 + $0x508] sm:$0xff]
        %v300 = vld [vmem:[%s117 + $0x510] sm:$0xff]
        %v301 = vld [vmem:[%s117 + $0x518] sm:$0xff]
        %v302 = vld [vmem:[%s117 + $0x520] sm:$0xff]
        %v303 = vld [vmem:[%s117 + $0x528] sm:$0xff]
        %v304 = vld [vmem:[%s117 + $0x530] sm:$0xff]
        %v305 = vld [vmem:[%s117 + $0x538] sm:$0xff]
        %v306 = vld [vmem:[%s117 + $0x540] sm:$0xff]
        %v307 = vld [vmem:[%s117 + $0x548] sm:$0xff]
        %v308 = vld [vmem:[%s117 + $0x550] sm:$0xff]
        %v309 = vld [vmem:[%s117 + $0x558] sm:$0xff]
        %v310 = vld [vmem:[%s117 + $0x560] sm:$0xff]
        %v311 = vld [vmem:[%s117 + $0x568] sm:$0xff]
        %v312 = vld [vmem:[%s117 + $0x570] sm:$0xff]
        %v313 = vld [vmem:[%s117 + $0x578] sm:$0xff]
        %v314 = vld [vmem:[%s117 + $0x580] sm:$0xff]
        %v315 = vld [vmem:[%s117 + $0x588] sm:$0xff]
        %v316 = vld [vmem:[%s117 + $0x590] sm:$0xff]
        %v317 = vld [vmem:[%s117 + $0x598] sm:$0xff]
        %v318 = vld [vmem:[%s117 + $0x5a0] sm:$0xff]
        %v319 = vld [vmem:[%s117 + $0x5a8] sm:$0xff]
        %v320 = vld [vmem:[%s117 + $0x5b0] sm:$0xff]
        %v321 = vld [vmem:[%s117 + $0x5b8] sm:$0xff]
        %v322 = vld [vmem:[%s117 + $0x5c0] sm:$0xff]
        %v323 = vld [vmem:[%s117 + $0x5c8] sm:$0xff]
        %v324 = vld [vmem:[%s117 + $0x5d0] sm:$0xff]
        %v325 = vld [vmem:[%s117 + $0x5d8] sm:$0xff]
        %v326 = vld [vmem:[%s117 + $0x5e0] sm:$0xff]
        %v327 = vld [vmem:[%s117 + $0x5e8] sm:$0xff]
        %v328 = vld [vmem:[%s117 + $0x5f0] sm:$0xff]
        %v329 = vld [vmem:[%s117 + $0x5f8] sm:$0xff]
        %v330 = vld [vmem:[%s117 + $0x600] sm:$0xff]
        %v331 = vld [vmem:[%s117 + $0x608] sm:$0xff]
        %v332 = vld [vmem:[%s117 + $0x610] sm:$0xff]
        %v333 = vld [vmem:[%s117 + $0x618] sm:$0xff]
        %v334 = vld [vmem:[%s117 + $0x620] sm:$0xff]
        %v335 = vld [vmem:[%s117 + $0x628] sm:$0xff]
        %v336 = vld [vmem:[%s117 + $0x630] sm:$0xff]
        %v337 = vld [vmem:[%s117 + $0x638] sm:$0xff]
        %v338 = vld [vmem:[%s117 + $0x640] sm:$0xff]
        %v339 = vld [vmem:[%s117 + $0x648] sm:$0xff]
        %v340 = vld [vmem:[%s117 + $0x650] sm:$0xff]
        %v341 = vld [vmem:[%s117 + $0x658] sm:$0xff]
        %v342 = vld [vmem:[%s117 + $0x660] sm:$0xff]
        %v343 = vld [vmem:[%s117 + $0x668] sm:$0xff]
        %v344 = vld [vmem:[%s117 + $0x670] sm:$0xff]
        %v345 = vld [vmem:[%s117 + $0x678] sm:$0xff]
        %v346 = vld [vmem:[%s117 + $0x680] sm:$0xff]
        %v347 = vld [vmem:[%s117 + $0x688] sm:$0xff]
        %v348 = vld [vmem:[%s117 + $0x690] sm:$0xff]
        %v349 = vld [vmem:[%s117 + $0x698] sm:$0xff]
        %v350 = vld [vmem:[%s117 + $0x6a0] sm:$0xff]
        %v351 = vld [vmem:[%s117 + $0x6a8] sm:$0xff]
        %v352 = vld [vmem:[%s117 + $0x6b0] sm:$0xff]
        %v353 = vld [vmem:[%s117 + $0x6b8] sm:$0xff]
        %v354 = vld [vmem:[%s117 + $0x6c0] sm:$0xff]
        %v355 = vld [vmem:[%s117 + $0x6c8] sm:$0xff]
        %v356 = vld [vmem:[%s117 + $0x6d0] sm:$0xff]
        %v357 = vld [vmem:[%s117 + $0x6d8] sm:$0xff]
        %v358 = vld [vmem:[%s117 + $0x6e0] sm:$0xff]
        %v359 = vld [vmem:[%s117 + $0x6e8] sm:$0xff]
        %v360 = vld [vmem:[%s117 + $0x6f0] sm:$0xff]
        %v361 = vld [vmem:[%s117 + $0x6f8] sm:$0xff]
        %v362 = vld [vmem:[%s117 + $0x700] sm:$0xff]
        %v363 = vld [vmem:[%s117 + $0x708] sm:$0xff]
        %v364 = vld [vmem:[%s117 + $0x710] sm:$0xff]
        %v365 = vld [vmem:[%s117 + $0x718] sm:$0xff]
        %v366 = vld [vmem:[%s117 + $0x720] sm:$0xff]
        %v367 = vld [vmem:[%s117 + $0x728] sm:$0xff]
        %v368 = vld [vmem:[%s117 + $0x730] sm:$0xff]
        %v369 = vld [vmem:[%s117 + $0x738] sm:$0xff]
        %v370 = vld [vmem:[%s117 + $0x740] sm:$0xff]
        %v371 = vld [vmem:[%s117 + $0x748] sm:$0xff]
        %v372 = vld [vmem:[%s117 + $0x750] sm:$0xff]
        %v373 = vld [vmem:[%s117 + $0x758] sm:$0xff]
        %v374 = vld [vmem:[%s117 + $0x760] sm:$0xff]
        %v375 = vld [vmem:[%s117 + $0x768] sm:$0xff]
        %v376 = vld [vmem:[%s117 + $0x770] sm:$0xff]
        %v377 = vld [vmem:[%s117 + $0x778] sm:$0xff]
        %v378 = vld [vmem:[%s117 + $0x780] sm:$0xff]
        %v379 = vld [vmem:[%s117 + $0x788] sm:$0xff]
        %v380 = vld [vmem:[%s117 + $0x790] sm:$0xff]
        %v381 = vld [vmem:[%s117 + $0x798] sm:$0xff]
        %v382 = vld [vmem:[%s117 + $0x7a0] sm:$0xff]
        %v383 = vld [vmem:[%s117 + $0x7a8] sm:$0xff]
        %v384 = vld [vmem:[%s117 + $0x7b0] sm:$0xff]
        %v385 = vld [vmem:[%s117 + $0x7b8] sm:$0xff]
        %v386 = vld [vmem:[%s117 + $0x7c0] sm:$0xff]
        %v387 = vld [vmem:[%s117 + $0x7c8] sm:$0xff]
        %v388 = vld [vmem:[%s117 + $0x7d0] sm:$0xff]
        %v389 = vld [vmem:[%s117 + $0x7d8] sm:$0xff]
        %v390 = vld [vmem:[%s117 + $0x7e0] sm:$0xff]
        %v391 = vld [vmem:[%s117 + $0x7e8] sm:$0xff]
        %v392 = vld [vmem:[%s117 + $0x7f0] sm:$0xff]
        %v393 = vld [vmem:[%s117 + $0x7f8] sm:$0xff]
        %v394 = vld [vmem:[%s117 + $0x800] sm:$0xff]
        %v395 = vld [vmem:[%s117 + $0x808] sm:$0xff]
        %v396 = vld [vmem:[%s117 + $0x810] sm:$0xff]
        %v397 = vld [vmem:[%s117 + $0x818] sm:$0xff]
        %v398 = vld [vmem:[%s117 + $0x820] sm:$0xff]
        %v399 = vld [vmem:[%s117 + $0x828] sm:$0xff]
        %v400 = vld [vmem:[%s117 + $0x830] sm:$0xff]
        %v401 = vld [vmem:[%s117 + $0x838] sm:$0xff]
        %v402 = vld [vmem:[%s117 + $0x840] sm:$0xff]
        %v403 = vld [vmem:[%s117 + $0x848] sm:$0xff]
        %v404 = vld [vmem:[%s117 + $0x850] sm:$0xff]
        %v405 = vld [vmem:[%s117 + $0x858] sm:$0xff]
        %v406 = vld [vmem:[%s117 + $0x860] sm:$0xff]
        %v407 = vld [vmem:[%s117 + $0x868] sm:$0xff]
        %v408 = vld [vmem:[%s117 + $0x870] sm:$0xff]
        %v409 = vld [vmem:[%s117 + $0x878] sm:$0xff]
        %v410 = vld [vmem:[%s117 + $0x880] sm:$0xff]
        %v411 = vld [vmem:[%s117 + $0x888] sm:$0xff]
        %v412 = vld [vmem:[%s117 + $0x890] sm:$0xff]
        %v413 = vld [vmem:[%s117 + $0x898] sm:$0xff]
        %v414 = vld [vmem:[%s117 + $0x8a0] sm:$0xff]
        %v415 = vld [vmem:[%s117 + $0x8a8] sm:$0xff]
        %v416 = vld [vmem:[%s117 + $0x8b0] sm:$0xff]
        %v417 = vld [vmem:[%s117 + $0x8b8] sm:$0xff]
        %v418 = vld [vmem:[%s117 + $0x8c0] sm:$0xff]
        %v419 = vld [vmem:[%s117 + $0x8c8] sm:$0xff]
        %v420 = vld [vmem:[%s117 + $0x8d0] sm:$0xff]
        %v421 = vld [vmem:[%s117 + $0x8d8] sm:$0xff]
        %v422 = vld [vmem:[%s117 + $0x8e0] sm:$0xff]
        %v423 = vld [vmem:[%s117 + $0x8e8] sm:$0xff]
        %v424 = vld [vmem:[%s117 + $0x8f0] sm:$0xff]
        %v425 = vld [vmem:[%s117 + $0x8f8] sm:$0xff]
        %v426 = vld [vmem:[%s117 + $0x900] sm:$0xff]
        %v427 = vld [vmem:[%s117 + $0x908] sm:$0xff]
        %v428 = vld [vmem:[%s117 + $0x910] sm:$0xff]
        %v429 = vld [vmem:[%s117 + $0x918] sm:$0xff]
        %v430 = vld [vmem:[%s117 + $0x920] sm:$0xff]
        %v431 = vld [vmem:[%s117 + $0x928] sm:$0xff]
        %v432 = vld [vmem:[%s117 + $0x930] sm:$0xff]
        %v433 = vld [vmem:[%s117 + $0x938] sm:$0xff]
        %v434 = vld [vmem:[%s117 + $0x940] sm:$0xff]
        %v435 = vld [vmem:[%s117 + $0x948] sm:$0xff]
        %v436 = vld [vmem:[%s117 + $0x950] sm:$0xff]
        %v437 = vld [vmem:[%s117 + $0x958] sm:$0xff]
        %v438 = vld [vmem:[%s117 + $0x960] sm:$0xff]
        %v439 = vld [vmem:[%s117 + $0x968] sm:$0xff]
        %v440 = vld [vmem:[%s117 + $0x970] sm:$0xff]
        %v441 = vld [vmem:[%s117 + $0x978] sm:$0xff]
        %v442 = vld [vmem:[%s117 + $0x980] sm:$0xff]
        %v443 = vld [vmem:[%s117 + $0x988] sm:$0xff]
        %v444 = vld [vmem:[%s117 + $0x990] sm:$0xff]
        %v445 = vld [vmem:[%s117 + $0x998] sm:$0xff]
        %v446 = vld [vmem:[%s117 + $0x9a0] sm:$0xff]
        %v447 = vld [vmem:[%s117 + $0x9a8] sm:$0xff]
        %v448 = vld [vmem:[%s117 + $0x9b0] sm:$0xff]
        %v449 = vld [vmem:[%s117 + $0x9b8] sm:$0xff]
        %v450 = vld [vmem:[%s117 + $0x9c0] sm:$0xff]
        %v451 = vld [vmem:[%s117 + $0x9c8] sm:$0xff]
        %v452 = vld [vmem:[%s117 + $0x9d0] sm:$0xff]
        %v453 = vld [vmem:[%s117 + $0x9d8] sm:$0xff]
        %v454 = vld [vmem:[%s117 + $0x9e0] sm:$0xff]
        %v455 = vld [vmem:[%s117 + $0x9e8] sm:$0xff]
        %v456 = vld [vmem:[%s117 + $0x9f0] sm:$0xff]
        %v457 = vld [vmem:[%s117 + $0x9f8] sm:$0xff]
        %v458 = vld [vmem:[%s117 + $0xa00] sm:$0xff]
        %v459 = vld [vmem:[%s117 + $0xa08] sm:$0xff]
        %v460 = vld [vmem:[%s117 + $0xa10] sm:$0xff]
        %v461 = vld [vmem:[%s117 + $0xa18] sm:$0xff]
        %v462 = vld [vmem:[%s117 + $0xa20] sm:$0xff]
        %v463 = vld [vmem:[%s117 + $0xa28] sm:$0xff]
        %v464 = vld [vmem:[%s117 + $0xa30] sm:$0xff]
        %v465 = vld [vmem:[%s117 + $0xa38] sm:$0xff]
        %v466 = vld [vmem:[%s117 + $0xa40] sm:$0xff]
        %v467 = vld [vmem:[%s117 + $0xa48] sm:$0xff]
        %v468 = vld [vmem:[%s117 + $0xa50] sm:$0xff]
        %v469 = vld [vmem:[%s117 + $0xa58] sm:$0xff]
        %v470 = vld [vmem:[%s117 + $0xa60] sm:$0xff]
        %v471 = vld [vmem:[%s117 + $0xa68] sm:$0xff]
        %v472 = vld [vmem:[%s117 + $0xa70] sm:$0xff]
        %v473 = vld [vmem:[%s117 + $0xa78] sm:$0xff]
        %v474 = vld [vmem:[%s117 + $0xa80] sm:$0xff]
        %v475 = vld [vmem:[%s117 + $0xa88] sm:$0xff]
        %v476 = vld [vmem:[%s117 + $0xa90] sm:$0xff]
        %v477 = vld [vmem:[%s117 + $0xa98] sm:$0xff]
        %v478 = vld [vmem:[%s117 + $0xaa0] sm:$0xff]
        %v479 = vld [vmem:[%s117 + $0xaa8] sm:$0xff]
        %v480 = vld [vmem:[%s117 + $0xab0] sm:$0xff]
        %v481 = vld [vmem:[%s117 + $0xab8] sm:$0xff]
        %v482 = vld [vmem:[%s117 + $0xac0] sm:$0xff]
        %v483 = vld [vmem:[%s117 + $0xac8] sm:$0xff]
        %v484 = vld [vmem:[%s117 + $0xad0] sm:$0xff]
        %v485 = vld [vmem:[%s117 + $0xad8] sm:$0xff]
        %v486 = vld [vmem:[%s117 + $0xae0] sm:$0xff]
        %v487 = vld [vmem:[%s117 + $0xae8] sm:$0xff]
        %v488 = vld [vmem:[%s117 + $0xaf0] sm:$0xff]
        %v489 = vld [vmem:[%s117 + $0xaf8] sm:$0xff]
        %v490 = vld [vmem:[%s117 + $0xb00] sm:$0xff]
        %v491 = vld [vmem:[%s117 + $0xb08] sm:$0xff]
        %v492 = vld [vmem:[%s117 + $0xb10] sm:$0xff]
        %v493 = vld [vmem:[%s117 + $0xb18] sm:$0xff]
        %v494 = vld [vmem:[%s117 + $0xb20] sm:$0xff]
        %v495 = vld [vmem:[%s117 + $0xb28] sm:$0xff]
        %v496 = vld [vmem:[%s117 + $0xb30] sm:$0xff]
        %v497 = vld [vmem:[%s117 + $0xb38] sm:$0xff]
        %v498 = vld [vmem:[%s117 + $0xb40] sm:$0xff]
        %v499 = vld [vmem:[%s117 + $0xb48] sm:$0xff]
        %v500 = vld [vmem:[%s117 + $0xb50] sm:$0xff]
        %v501 = vld [vmem:[%s117 + $0xb58] sm:$0xff]
        %v502 = vld [vmem:[%s117 + $0xb60] sm:$0xff]
        %v503 = vld [vmem:[%s117 + $0xb68] sm:$0xff]
        %v504 = vld [vmem:[%s117 + $0xb70] sm:$0xff]
        %v505 = vld [vmem:[%s117 + $0xb78] sm:$0xff]
        %v506 = vld [vmem:[%s117 + $0xb80] sm:$0xff]
        %v507 = vld [vmem:[%s117 + $0xb88] sm:$0xff]
        %v508 = vld [vmem:[%s117 + $0xb90] sm:$0xff]
        %v509 = vld [vmem:[%s117 + $0xb98] sm:$0xff]
        %v510 = vld [vmem:[%s117 + $0xba0] sm:$0xff]
        %v511 = vld [vmem:[%s117 + $0xba8] sm:$0xff]
        %v512 = vld [vmem:[%s117 + $0xbb0] sm:$0xff]
        %v513 = vld [vmem:[%s117 + $0xbb8] sm:$0xff]
        %v514 = vld [vmem:[%s117 + $0xbc0] sm:$0xff]
        %v515 = vld [vmem:[%s117 + $0xbc8] sm:$0xff]
        %v516 = vld [vmem:[%s117 + $0xbd0] sm:$0xff]
        %v517 = vld [vmem:[%s117 + $0xbd8] sm:$0xff]
        %v518 = vld [vmem:[%s117 + $0xbe0] sm:$0xff]
        %v519 = vld [vmem:[%s117 + $0xbe8] sm:$0xff]
        %v520 = vld [vmem:[%s117 + $0xbf0] sm:$0xff]
        %v521 = vld [vmem:[%s117 + $0xbf8] sm:$0xff]
        %v522 = vld [vmem:[%s117 + $0xc00] sm:$0xff]
        %v523 = vld [vmem:[%s117 + $0xc08] sm:$0xff]
        %v524 = vld [vmem:[%s117 + $0xc10] sm:$0xff]
        %v525 = vld [vmem:[%s117 + $0xc18] sm:$0xff]
        %v526 = vld [vmem:[%s117 + $0xc20] sm:$0xff]
        %v527 = vld [vmem:[%s117 + $0xc28] sm:$0xff]
        %v528 = vld [vmem:[%s117 + $0xc30] sm:$0xff]
        %v529 = vld [vmem:[%s117 + $0xc38] sm:$0xff]
        %v530 = vld [vmem:[%s117 + $0xc40] sm:$0xff]
        %v531 = vld [vmem:[%s117 + $0xc48] sm:$0xff]
        %v532 = vld [vmem:[%s117 + $0xc50] sm:$0xff]
        %v533 = vld [vmem:[%s117 + $0xc58] sm:$0xff]
        %v534 = vld [vmem:[%s117 + $0xc60] sm:$0xff]
        %v535 = vld [vmem:[%s117 + $0xc68] sm:$0xff]
        %v536 = vld [vmem:[%s117 + $0xc70] sm:$0xff]
        %v537 = vld [vmem:[%s117 + $0xc78] sm:$0xff]
        %v538 = vld [vmem:[%s117 + $0xc80] sm:$0xff]
        %v539 = vld [vmem:[%s117 + $0xc88] sm:$0xff]
        %v540 = vld [vmem:[%s117 + $0xc90] sm:$0xff]
        %v541 = vld [vmem:[%s117 + $0xc98] sm:$0xff]
        %v542 = vld [vmem:[%s117 + $0xca0] sm:$0xff]
        %v543 = vld [vmem:[%s117 + $0xca8] sm:$0xff]
        %v544 = vld [vmem:[%s117 + $0xcb0] sm:$0xff]
        %v545 = vld [vmem:[%s117 + $0xcb8] sm:$0xff]
        %v546 = vld [vmem:[%s117 + $0xcc0] sm:$0xff]
        %v547 = vld [vmem:[%s117 + $0xcc8] sm:$0xff]
        %v548 = vld [vmem:[%s117 + $0xcd0] sm:$0xff]
        %v549 = vld [vmem:[%s117 + $0xcd8] sm:$0xff]
        %v550 = vld [vmem:[%s117 + $0xce0] sm:$0xff]
        %v551 = vld [vmem:[%s117 + $0xce8] sm:$0xff]
        %v552 = vld [vmem:[%s117 + $0xcf0] sm:$0xff]
        %v553 = vld [vmem:[%s117 + $0xcf8] sm:$0xff]
        %v554 = vld [vmem:[%s117 + $0xd00] sm:$0xff]
        %v555 = vld [vmem:[%s117 + $0xd08] sm:$0xff]
        %v556 = vld [vmem:[%s117 + $0xd10] sm:$0xff]
        %v557 = vld [vmem:[%s117 + $0xd18] sm:$0xff]
        %v558 = vld [vmem:[%s117 + $0xd20] sm:$0xff]
        %v559 = vld [vmem:[%s117 + $0xd28] sm:$0xff]
        %v560 = vld [vmem:[%s117 + $0xd30] sm:$0xff]
        %v561 = vld [vmem:[%s117 + $0xd38] sm:$0xff]
        %v562 = vld [vmem:[%s117 + $0xd40] sm:$0xff]
        %v563 = vld [vmem:[%s117 + $0xd48] sm:$0xff]
        %v564 = vld [vmem:[%s117 + $0xd50] sm:$0xff]
        %v565 = vld [vmem:[%s117 + $0xd58] sm:$0xff]
        %v566 = vld [vmem:[%s117 + $0xd60] sm:$0xff]
        %v567 = vld [vmem:[%s117 + $0xd68] sm:$0xff]
        %v568 = vld [vmem:[%s117 + $0xd70] sm:$0xff]
        %v569 = vld [vmem:[%s117 + $0xd78] sm:$0xff]
        %v570 = vld [vmem:[%s117 + $0xd80] sm:$0xff]
        %v571 = vld [vmem:[%s117 + $0xd88] sm:$0xff]
        %v572 = vld [vmem:[%s117 + $0xd90] sm:$0xff]
        %v573 = vld [vmem:[%s117 + $0xd98] sm:$0xff]
        %v574 = vld [vmem:[%s117 + $0xda0] sm:$0xff]
        %v575 = vld [vmem:[%s117 + $0xda8] sm:$0xff]
        %v576 = vld [vmem:[%s117 + $0xdb0] sm:$0xff]
        %v577 = vld [vmem:[%s117 + $0xdb8] sm:$0xff]
        %v578 = vld [vmem:[%s117 + $0xdc0] sm:$0xff]
        %v579 = vld [vmem:[%s117 + $0xdc8] sm:$0xff]
        %v580 = vld [vmem:[%s117 + $0xdd0] sm:$0xff]
        %v581 = vld [vmem:[%s117 + $0xdd8] sm:$0xff]
        %v582 = vld [vmem:[%s117 + $0xde0] sm:$0xff]
        %v583 = vld [vmem:[%s117 + $0xde8] sm:$0xff]
        %v584 = vld [vmem:[%s117 + $0xdf0] sm:$0xff]
        %v585 = vld [vmem:[%s117 + $0xdf8] sm:$0xff]
        %v586 = vld [vmem:[%s117 + $0xe00] sm:$0xff]
        %v587 = vld [vmem:[%s117 + $0xe08] sm:$0xff]
        %v588 = vld [vmem:[%s117 + $0xe10] sm:$0xff]
        %v589 = vld [vmem:[%s117 + $0xe18] sm:$0xff]
        %v590 = vld [vmem:[%s117 + $0xe20] sm:$0xff]
        %v591 = vld [vmem:[%s117 + $0xe28] sm:$0xff]
        %v592 = vld [vmem:[%s117 + $0xe30] sm:$0xff]
        %v593 = vld [vmem:[%s117 + $0xe38] sm:$0xff]
        %v594 = vld [vmem:[%s117 + $0xe40] sm:$0xff]
        %v595 = vld [vmem:[%s117 + $0xe48] sm:$0xff]
        %v596 = vld [vmem:[%s117 + $0xe50] sm:$0xff]
        %v597 = vld [vmem:[%s117 + $0xe58] sm:$0xff]
        %v598 = vld [vmem:[%s117 + $0xe60] sm:$0xff]
        %v599 = vld [vmem:[%s117 + $0xe68] sm:$0xff]
        %v600 = vld [vmem:[%s117 + $0xe70] sm:$0xff]
        %v601 = vld [vmem:[%s117 + $0xe78] sm:$0xff]
        %v602 = vld [vmem:[%s117 + $0xe80] sm:$0xff]
        %v603 = vld [vmem:[%s117 + $0xe88] sm:$0xff]
        %v604 = vld [vmem:[%s117 + $0xe90] sm:$0xff]
        %v605 = vld [vmem:[%s117 + $0xe98] sm:$0xff]
        %v606 = vld [vmem:[%s117 + $0xea0] sm:$0xff]
        %v607 = vld [vmem:[%s117 + $0xea8] sm:$0xff]
        %v608 = vld [vmem:[%s117 + $0xeb0] sm:$0xff]
        %v609 = vld [vmem:[%s117 + $0xeb8] sm:$0xff]
        %v610 = vld [vmem:[%s117 + $0xec0] sm:$0xff]
        %v611 = vld [vmem:[%s117 + $0xec8] sm:$0xff]
        %v612 = vld [vmem:[%s117 + $0xed0] sm:$0xff]
        %v613 = vld [vmem:[%s117 + $0xed8] sm:$0xff]
        %v614 = vld [vmem:[%s117 + $0xee0] sm:$0xff]
        %v615 = vld [vmem:[%s117 + $0xee8] sm:$0xff]
        %v616 = vld [vmem:[%s117 + $0xef0] sm:$0xff]
        %v617 = vld [vmem:[%s117 + $0xef8] sm:$0xff]
        %618 = vxpose.xlu0.b32.start [1/16] %v138, 128
        %619 = vxpose.xlu0.b32.cont [2/16] %v143, 128
        %620 = vxpose.xlu0.b32.cont [3/16] %v148, 128
        %621 = vxpose.xlu0.b32.cont [4/16] %v153, 128
        %622 = vxpose.xlu0.b32.cont [5/16] %v158, 128
        %623 = vxpose.xlu0.b32.cont [6/16] %v163, 128
        %624 = vxpose.xlu0.b32.cont [7/16] %v168, 128
        %625 = vxpose.xlu0.b32.cont [8/16] %v173, 128
        %626 = vxpose.xlu0.b32.cont [9/16] %v178, 128
        %627 = vxpose.xlu0.b32.cont [10/16] %v183, 128
        %628 = vxpose.xlu0.b32.cont [11/16] %v188, 128
        %629 = vxpose.xlu0.b32.cont [12/16] %v193, 128
        %630 = vxpose.xlu0.b32.cont [13/16] %v198, 128
        %631 = vxpose.xlu0.b32.cont [14/16] %v203, 128
        %632 = vxpose.xlu0.b32.cont [15/16] %v208, 128
        %633 = vxpose.xlu0.b32.end [16/16] %v213, 128
        %v634 = vpop.trf.xlu0
        %v635 = vpop.trf.xlu0
        %v636 = vpop.trf.xlu0
        %v637 = vpop.trf.xlu0
        %v638 = vpop.trf.xlu0
        %v639 = vpop.trf.xlu0
        %v640 = vpop.trf.xlu0
        %v641 = vpop.trf.xlu0
        %v642 = vpop.trf.xlu0
        %v643 = vpop.trf.xlu0
        %v644 = vpop.trf.xlu0
        %v645 = vpop.trf.xlu0
        %v646 = vpop.trf.xlu0
        %v647 = vpop.trf.xlu0
        %v648 = vpop.trf.xlu0
        %v649 = vpop.trf.xlu0
        %650 = vxpose.xlu0.b32.start [1/16] %v139, 128
        %651 = vxpose.xlu0.b32.cont [2/16] %v144, 128
        %652 = vxpose.xlu0.b32.cont [3/16] %v149, 128
        %653 = vxpose.xlu0.b32.cont [4/16] %v154, 128
        %654 = vxpose.xlu0.b32.cont [5/16] %v159, 128
        %655 = vxpose.xlu0.b32.cont [6/16] %v164, 128
        %656 = vxpose.xlu0.b32.cont [7/16] %v169, 128
        %657 = vxpose.xlu0.b32.cont [8/16] %v174, 128
        %658 = vxpose.xlu0.b32.cont [9/16] %v179, 128
        %659 = vxpose.xlu0.b32.cont [10/16] %v184, 128
        %660 = vxpose.xlu0.b32.cont [11/16] %v189, 128
        %661 = vxpose.xlu0.b32.cont [12/16] %v194, 128
        %662 = vxpose.xlu0.b32.cont [13/16] %v199, 128
        %663 = vxpose.xlu0.b32.cont [14/16] %v204, 128
        %664 = vxpose.xlu0.b32.cont [15/16] %v209, 128
        %665 = vxpose.xlu0.b32.end [16/16] %v214, 128
        %v666 = vpop.trf.xlu0
        %v667 = vpop.trf.xlu0
        %v668 = vpop.trf.xlu0
        %v669 = vpop.trf.xlu0
        %v670 = vpop.trf.xlu0
        %v671 = vpop.trf.xlu0
        %v672 = vpop.trf.xlu0
        %v673 = vpop.trf.xlu0
        %v674 = vpop.trf.xlu0
        %v675 = vpop.trf.xlu0
        %v676 = vpop.trf.xlu0
        %v677 = vpop.trf.xlu0
        %v678 = vpop.trf.xlu0
        %v679 = vpop.trf.xlu0
        %v680 = vpop.trf.xlu0
        %v681 = vpop.trf.xlu0
        %682 = vxpose.xlu0.b32.start [1/16] %v140, 128
        %683 = vxpose.xlu0.b32.cont [2/16] %v145, 128
        %684 = vxpose.xlu0.b32.cont [3/16] %v150, 128
        %685 = vxpose.xlu0.b32.cont [4/16] %v155, 128
        %686 = vxpose.xlu0.b32.cont [5/16] %v160, 128
        %687 = vxpose.xlu0.b32.cont [6/16] %v165, 128
        %688 = vxpose.xlu0.b32.cont [7/16] %v170, 128
        %689 = vxpose.xlu0.b32.cont [8/16] %v175, 128
        %690 = vxpose.xlu0.b32.cont [9/16] %v180, 128
        %691 = vxpose.xlu0.b32.cont [10/16] %v185, 128
        %692 = vxpose.xlu0.b32.cont [11/16] %v190, 128
        %693 = vxpose.xlu0.b32.cont [12/16] %v195, 128
        %694 = vxpose.xlu0.b32.cont [13/16] %v200, 128
        %695 = vxpose.xlu0.b32.cont [14/16] %v205, 128
        %696 = vxpose.xlu0.b32.cont [15/16] %v210, 128
        %697 = vxpose.xlu0.b32.end [16/16] %v215, 128
        %v698 = vpop.trf.xlu0
        %v699 = vpop.trf.xlu0
        %v700 = vpop.trf.xlu0
        %v701 = vpop.trf.xlu0
        %v702 = vpop.trf.xlu0
        %v703 = vpop.trf.xlu0
        %v704 = vpop.trf.xlu0
        %v705 = vpop.trf.xlu0
        %v706 = vpop.trf.xlu0
        %v707 = vpop.trf.xlu0
        %v708 = vpop.trf.xlu0
        %v709 = vpop.trf.xlu0
        %v710 = vpop.trf.xlu0
        %v711 = vpop.trf.xlu0
        %v712 = vpop.trf.xlu0
        %v713 = vpop.trf.xlu0
        %714 = vxpose.xlu0.b32.start [1/16] %v141, 128
        %715 = vxpose.xlu0.b32.cont [2/16] %v146, 128
        %716 = vxpose.xlu0.b32.cont [3/16] %v151, 128
        %717 = vxpose.xlu0.b32.cont [4/16] %v156, 128
        %718 = vxpose.xlu0.b32.cont [5/16] %v161, 128
        %719 = vxpose.xlu0.b32.cont [6/16] %v166, 128
        %720 = vxpose.xlu0.b32.cont [7/16] %v171, 128
        %721 = vxpose.xlu0.b32.cont [8/16] %v176, 128
        %722 = vxpose.xlu0.b32.cont [9/16] %v181, 128
        %723 = vxpose.xlu0.b32.cont [10/16] %v186, 128
        %724 = vxpose.xlu0.b32.cont [11/16] %v191, 128
        %725 = vxpose.xlu0.b32.cont [12/16] %v196, 128
        %726 = vxpose.xlu0.b32.cont [13/16] %v201, 128
        %727 = vxpose.xlu0.b32.cont [14/16] %v206, 128
        %728 = vxpose.xlu0.b32.cont [15/16] %v211, 128
        %729 = vxpose.xlu0.b32.end [16/16] %v216, 128
        %v730 = vpop.trf.xlu0
        %v731 = vpop.trf.xlu0
        %v732 = vpop.trf.xlu0
        %v733 = vpop.trf.xlu0
        %v734 = vpop.trf.xlu0
        %v735 = vpop.trf.xlu0
        %v736 = vpop.trf.xlu0
        %v737 = vpop.trf.xlu0
        %v738 = vpop.trf.xlu0
        %v739 = vpop.trf.xlu0
        %v740 = vpop.trf.xlu0
        %v741 = vpop.trf.xlu0
        %v742 = vpop.trf.xlu0
        %v743 = vpop.trf.xlu0
        %v744 = vpop.trf.xlu0
        %v745 = vpop.trf.xlu0
        %746 = vxpose.xlu0.b32.start [1/16] %v142, 128
        %747 = vxpose.xlu0.b32.cont [2/16] %v147, 128
        %748 = vxpose.xlu0.b32.cont [3/16] %v152, 128
        %749 = vxpose.xlu0.b32.cont [4/16] %v157, 128
        %750 = vxpose.xlu0.b32.cont [5/16] %v162, 128
        %751 = vxpose.xlu0.b32.cont [6/16] %v167, 128
        %752 = vxpose.xlu0.b32.cont [7/16] %v172, 128
        %753 = vxpose.xlu0.b32.cont [8/16] %v177, 128
        %754 = vxpose.xlu0.b32.cont [9/16] %v182, 128
        %755 = vxpose.xlu0.b32.cont [10/16] %v187, 128
        %756 = vxpose.xlu0.b32.cont [11/16] %v192, 128
        %757 = vxpose.xlu0.b32.cont [12/16] %v197, 128
        %758 = vxpose.xlu0.b32.cont [13/16] %v202, 128
        %759 = vxpose.xlu0.b32.cont [14/16] %v207, 128
        %760 = vxpose.xlu0.b32.cont [15/16] %v212, 128
        %761 = vxpose.xlu0.b32.end [16/16] %v217, 128
        %v762 = vpop.trf.xlu0
        %v763 = vpop.trf.xlu0
        %v764 = vpop.trf.xlu0
        %v765 = vpop.trf.xlu0
        %v766 = vpop.trf.xlu0
        %v767 = vpop.trf.xlu0
        %v768 = vpop.trf.xlu0
        %v769 = vpop.trf.xlu0
        %v770 = vpop.trf.xlu0
        %v771 = vpop.trf.xlu0
        %v772 = vpop.trf.xlu0
        %v773 = vpop.trf.xlu0
        %v774 = vpop.trf.xlu0
        %v775 = vpop.trf.xlu0
        %v776 = vpop.trf.xlu0
        %v777 = vpop.trf.xlu0
        %778 = vxpose.xlu0.b32.start [1/16] %v218, 128
        %779 = vxpose.xlu0.b32.cont [2/16] %v223, 128
        %780 = vxpose.xlu0.b32.cont [3/16] %v228, 128
        %781 = vxpose.xlu0.b32.cont [4/16] %v233, 128
        %782 = vxpose.xlu0.b32.cont [5/16] %v238, 128
        %783 = vxpose.xlu0.b32.cont [6/16] %v243, 128
        %784 = vxpose.xlu0.b32.cont [7/16] %v248, 128
        %785 = vxpose.xlu0.b32.cont [8/16] %v253, 128
        %786 = vxpose.xlu0.b32.cont [9/16] %v258, 128
        %787 = vxpose.xlu0.b32.cont [10/16] %v263, 128
        %788 = vxpose.xlu0.b32.cont [11/16] %v268, 128
        %789 = vxpose.xlu0.b32.cont [12/16] %v273, 128
        %790 = vxpose.xlu0.b32.cont [13/16] %v278, 128
        %791 = vxpose.xlu0.b32.cont [14/16] %v283, 128
        %792 = vxpose.xlu0.b32.cont [15/16] %v288, 128
        %793 = vxpose.xlu0.b32.end [16/16] %v293, 128
        %v794 = vpop.trf.xlu0
        %v795 = vpop.trf.xlu0
        %v796 = vpop.trf.xlu0
        %v797 = vpop.trf.xlu0
        %v798 = vpop.trf.xlu0
        %v799 = vpop.trf.xlu0
        %v800 = vpop.trf.xlu0
        %v801 = vpop.trf.xlu0
        %v802 = vpop.trf.xlu0
        %v803 = vpop.trf.xlu0
        %v804 = vpop.trf.xlu0
        %v805 = vpop.trf.xlu0
        %v806 = vpop.trf.xlu0
        %v807 = vpop.trf.xlu0
        %v808 = vpop.trf.xlu0
        %v809 = vpop.trf.xlu0
        %810 = vxpose.xlu0.b32.start [1/16] %v219, 128
        %811 = vxpose.xlu0.b32.cont [2/16] %v224, 128
        %812 = vxpose.xlu0.b32.cont [3/16] %v229, 128
        %813 = vxpose.xlu0.b32.cont [4/16] %v234, 128
        %814 = vxpose.xlu0.b32.cont [5/16] %v239, 128
        %815 = vxpose.xlu0.b32.cont [6/16] %v244, 128
        %816 = vxpose.xlu0.b32.cont [7/16] %v249, 128
        %817 = vxpose.xlu0.b32.cont [8/16] %v254, 128
        %818 = vxpose.xlu0.b32.cont [9/16] %v259, 128
        %819 = vxpose.xlu0.b32.cont [10/16] %v264, 128
        %820 = vxpose.xlu0.b32.cont [11/16] %v269, 128
        %821 = vxpose.xlu0.b32.cont [12/16] %v274, 128
        %822 = vxpose.xlu0.b32.cont [13/16] %v279, 128
        %823 = vxpose.xlu0.b32.cont [14/16] %v284, 128
        %824 = vxpose.xlu0.b32.cont [15/16] %v289, 128
        %825 = vxpose.xlu0.b32.end [16/16] %v294, 128
        %v826 = vpop.trf.xlu0
        %v827 = vpop.trf.xlu0
        %v828 = vpop.trf.xlu0
        %v829 = vpop.trf.xlu0
        %v830 = vpop.trf.xlu0
        %v831 = vpop.trf.xlu0
        %v832 = vpop.trf.xlu0
        %v833 = vpop.trf.xlu0
        %v834 = vpop.trf.xlu0
        %v835 = vpop.trf.xlu0
        %v836 = vpop.trf.xlu0
        %v837 = vpop.trf.xlu0
        %v838 = vpop.trf.xlu0
        %v839 = vpop.trf.xlu0
        %v840 = vpop.trf.xlu0
        %v841 = vpop.trf.xlu0
        %842 = vxpose.xlu0.b32.start [1/16] %v220, 128
        %843 = vxpose.xlu0.b32.cont [2/16] %v225, 128
        %844 = vxpose.xlu0.b32.cont [3/16] %v230, 128
        %845 = vxpose.xlu0.b32.cont [4/16] %v235, 128
        %846 = vxpose.xlu0.b32.cont [5/16] %v240, 128
        %847 = vxpose.xlu0.b32.cont [6/16] %v245, 128
        %848 = vxpose.xlu0.b32.cont [7/16] %v250, 128
        %849 = vxpose.xlu0.b32.cont [8/16] %v255, 128
        %850 = vxpose.xlu0.b32.cont [9/16] %v260, 128
        %851 = vxpose.xlu0.b32.cont [10/16] %v265, 128
        %852 = vxpose.xlu0.b32.cont [11/16] %v270, 128
        %853 = vxpose.xlu0.b32.cont [12/16] %v275, 128
        %854 = vxpose.xlu0.b32.cont [13/16] %v280, 128
        %855 = vxpose.xlu0.b32.cont [14/16] %v285, 128
        %856 = vxpose.xlu0.b32.cont [15/16] %v290, 128
        %857 = vxpose.xlu0.b32.end [16/16] %v295, 128
        %v858 = vpop.trf.xlu0
        %v859 = vpop.trf.xlu0
        %v860 = vpop.trf.xlu0
        %v861 = vpop.trf.xlu0
        %v862 = vpop.trf.xlu0
        %v863 = vpop.trf.xlu0
        %v864 = vpop.trf.xlu0
        %v865 = vpop.trf.xlu0
        %v866 = vpop.trf.xlu0
        %v867 = vpop.trf.xlu0
        %v868 = vpop.trf.xlu0
        %v869 = vpop.trf.xlu0
        %v870 = vpop.trf.xlu0
        %v871 = vpop.trf.xlu0
        %v872 = vpop.trf.xlu0
        %v873 = vpop.trf.xlu0
        %874 = vxpose.xlu0.b32.start [1/16] %v221, 128
        %875 = vxpose.xlu0.b32.cont [2/16] %v226, 128
        %876 = vxpose.xlu0.b32.cont [3/16] %v231, 128
        %877 = vxpose.xlu0.b32.cont [4/16] %v236, 128
        %878 = vxpose.xlu0.b32.cont [5/16] %v241, 128
        %879 = vxpose.xlu0.b32.cont [6/16] %v246, 128
        %880 = vxpose.xlu0.b32.cont [7/16] %v251, 128
        %881 = vxpose.xlu0.b32.cont [8/16] %v256, 128
        %882 = vxpose.xlu0.b32.cont [9/16] %v261, 128
        %883 = vxpose.xlu0.b32.cont [10/16] %v266, 128
        %884 = vxpose.xlu0.b32.cont [11/16] %v271, 128
        %885 = vxpose.xlu0.b32.cont [12/16] %v276, 128
        %886 = vxpose.xlu0.b32.cont [13/16] %v281, 128
        %887 = vxpose.xlu0.b32.cont [14/16] %v286, 128
        %888 = vxpose.xlu0.b32.cont [15/16] %v291, 128
        %889 = vxpose.xlu0.b32.end [16/16] %v296, 128
        %v890 = vpop.trf.xlu0
        %v891 = vpop.trf.xlu0
        %v892 = vpop.trf.xlu0
        %v893 = vpop.trf.xlu0
        %v894 = vpop.trf.xlu0
        %v895 = vpop.trf.xlu0
        %v896 = vpop.trf.xlu0
        %v897 = vpop.trf.xlu0
        %v898 = vpop.trf.xlu0
        %v899 = vpop.trf.xlu0
        %v900 = vpop.trf.xlu0
        %v901 = vpop.trf.xlu0
        %v902 = vpop.trf.xlu0
        %v903 = vpop.trf.xlu0
        %v904 = vpop.trf.xlu0
        %v905 = vpop.trf.xlu0
        %906 = vxpose.xlu0.b32.start [1/16] %v222, 128
        %907 = vxpose.xlu0.b32.cont [2/16] %v227, 128
        %908 = vxpose.xlu0.b32.cont [3/16] %v232, 128
        %909 = vxpose.xlu0.b32.cont [4/16] %v237, 128
        %910 = vxpose.xlu0.b32.cont [5/16] %v242, 128
        %911 = vxpose.xlu0.b32.cont [6/16] %v247, 128
        %912 = vxpose.xlu0.b32.cont [7/16] %v252, 128
        %913 = vxpose.xlu0.b32.cont [8/16] %v257, 128
        %914 = vxpose.xlu0.b32.cont [9/16] %v262, 128
        %915 = vxpose.xlu0.b32.cont [10/16] %v267, 128
        %916 = vxpose.xlu0.b32.cont [11/16] %v272, 128
        %917 = vxpose.xlu0.b32.cont [12/16] %v277, 128
        %918 = vxpose.xlu0.b32.cont [13/16] %v282, 128
        %919 = vxpose.xlu0.b32.cont [14/16] %v287, 128
        %920 = vxpose.xlu0.b32.cont [15/16] %v292, 128
        %921 = vxpose.xlu0.b32.end [16/16] %v297, 128
        %v922 = vpop.trf.xlu0
        %v923 = vpop.trf.xlu0
        %v924 = vpop.trf.xlu0
        %v925 = vpop.trf.xlu0
        %v926 = vpop.trf.xlu0
        %v927 = vpop.trf.xlu0
        %v928 = vpop.trf.xlu0
        %v929 = vpop.trf.xlu0
        %v930 = vpop.trf.xlu0
        %v931 = vpop.trf.xlu0
        %v932 = vpop.trf.xlu0
        %v933 = vpop.trf.xlu0
        %v934 = vpop.trf.xlu0
        %v935 = vpop.trf.xlu0
        %v936 = vpop.trf.xlu0
        %v937 = vpop.trf.xlu0
        %938 = vxpose.xlu0.b32.start [1/16] %v298, 128
        %939 = vxpose.xlu0.b32.cont [2/16] %v303, 128
        %940 = vxpose.xlu0.b32.cont [3/16] %v308, 128
        %941 = vxpose.xlu0.b32.cont [4/16] %v313, 128
        %942 = vxpose.xlu0.b32.cont [5/16] %v318, 128
        %943 = vxpose.xlu0.b32.cont [6/16] %v323, 128
        %944 = vxpose.xlu0.b32.cont [7/16] %v328, 128
        %945 = vxpose.xlu0.b32.cont [8/16] %v333, 128
        %946 = vxpose.xlu0.b32.cont [9/16] %v338, 128
        %947 = vxpose.xlu0.b32.cont [10/16] %v343, 128
        %948 = vxpose.xlu0.b32.cont [11/16] %v348, 128
        %949 = vxpose.xlu0.b32.cont [12/16] %v353, 128
        %950 = vxpose.xlu0.b32.cont [13/16] %v358, 128
        %951 = vxpose.xlu0.b32.cont [14/16] %v363, 128
        %952 = vxpose.xlu0.b32.cont [15/16] %v368, 128
        %953 = vxpose.xlu0.b32.end [16/16] %v373, 128
        %v954 = vpop.trf.xlu0
        %v955 = vpop.trf.xlu0
        %v956 = vpop.trf.xlu0
        %v957 = vpop.trf.xlu0
        %v958 = vpop.trf.xlu0
        %v959 = vpop.trf.xlu0
        %v960 = vpop.trf.xlu0
        %v961 = vpop.trf.xlu0
        %v962 = vpop.trf.xlu0
        %v963 = vpop.trf.xlu0
        %v964 = vpop.trf.xlu0
        %v965 = vpop.trf.xlu0
        %v966 = vpop.trf.xlu0
        %v967 = vpop.trf.xlu0
        %v968 = vpop.trf.xlu0
        %v969 = vpop.trf.xlu0
        %970 = vxpose.xlu0.b32.start [1/16] %v299, 128
        %971 = vxpose.xlu0.b32.cont [2/16] %v304, 128
        %972 = vxpose.xlu0.b32.cont [3/16] %v309, 128
        %973 = vxpose.xlu0.b32.cont [4/16] %v314, 128
        %974 = vxpose.xlu0.b32.cont [5/16] %v319, 128
        %975 = vxpose.xlu0.b32.cont [6/16] %v324, 128
        %976 = vxpose.xlu0.b32.cont [7/16] %v329, 128
        %977 = vxpose.xlu0.b32.cont [8/16] %v334, 128
        %978 = vxpose.xlu0.b32.cont [9/16] %v339, 128
        %979 = vxpose.xlu0.b32.cont [10/16] %v344, 128
        %980 = vxpose.xlu0.b32.cont [11/16] %v349, 128
        %981 = vxpose.xlu0.b32.cont [12/16] %v354, 128
        %982 = vxpose.xlu0.b32.cont [13/16] %v359, 128
        %983 = vxpose.xlu0.b32.cont [14/16] %v364, 128
        %984 = vxpose.xlu0.b32.cont [15/16] %v369, 128
        %985 = vxpose.xlu0.b32.end [16/16] %v374, 128
        %v986 = vpop.trf.xlu0
        %v987 = vpop.trf.xlu0
        %v988 = vpop.trf.xlu0
        %v989 = vpop.trf.xlu0
        %v990 = vpop.trf.xlu0
        %v991 = vpop.trf.xlu0
        %v992 = vpop.trf.xlu0
        %v993 = vpop.trf.xlu0
        %v994 = vpop.trf.xlu0
        %v995 = vpop.trf.xlu0
        %v996 = vpop.trf.xlu0
        %v997 = vpop.trf.xlu0
        %v998 = vpop.trf.xlu0
        %v999 = vpop.trf.xlu0
        %v1000 = vpop.trf.xlu0
        %v1001 = vpop.trf.xlu0
        %1002 = vxpose.xlu0.b32.start [1/16] %v300, 128
        %1003 = vxpose.xlu0.b32.cont [2/16] %v305, 128
        %1004 = vxpose.xlu0.b32.cont [3/16] %v310, 128
        %1005 = vxpose.xlu0.b32.cont [4/16] %v315, 128
        %1006 = vxpose.xlu0.b32.cont [5/16] %v320, 128
        %1007 = vxpose.xlu0.b32.cont [6/16] %v325, 128
        %1008 = vxpose.xlu0.b32.cont [7/16] %v330, 128
        %1009 = vxpose.xlu0.b32.cont [8/16] %v335, 128
        %1010 = vxpose.xlu0.b32.cont [9/16] %v340, 128
        %1011 = vxpose.xlu0.b32.cont [10/16] %v345, 128
        %1012 = vxpose.xlu0.b32.cont [11/16] %v350, 128
        %1013 = vxpose.xlu0.b32.cont [12/16] %v355, 128
        %1014 = vxpose.xlu0.b32.cont [13/16] %v360, 128
        %1015 = vxpose.xlu0.b32.cont [14/16] %v365, 128
        %1016 = vxpose.xlu0.b32.cont [15/16] %v370, 128
        %1017 = vxpose.xlu0.b32.end [16/16] %v375, 128
        %v1018 = vpop.trf.xlu0
        %v1019 = vpop.trf.xlu0
        %v1020 = vpop.trf.xlu0
        %v1021 = vpop.trf.xlu0
        %v1022 = vpop.trf.xlu0
        %v1023 = vpop.trf.xlu0
        %v1024 = vpop.trf.xlu0
        %v1025 = vpop.trf.xlu0
        %v1026 = vpop.trf.xlu0
        %v1027 = vpop.trf.xlu0
        %v1028 = vpop.trf.xlu0
        %v1029 = vpop.trf.xlu0
        %v1030 = vpop.trf.xlu0
        %v1031 = vpop.trf.xlu0
        %v1032 = vpop.trf.xlu0
        %v1033 = vpop.trf.xlu0
        %1034 = vxpose.xlu0.b32.start [1/16] %v301, 128
        %1035 = vxpose.xlu0.b32.cont [2/16] %v306, 128
        %1036 = vxpose.xlu0.b32.cont [3/16] %v311, 128
        %1037 = vxpose.xlu0.b32.cont [4/16] %v316, 128
        %1038 = vxpose.xlu0.b32.cont [5/16] %v321, 128
        %1039 = vxpose.xlu0.b32.cont [6/16] %v326, 128
        %1040 = vxpose.xlu0.b32.cont [7/16] %v331, 128
        %1041 = vxpose.xlu0.b32.cont [8/16] %v336, 128
        %1042 = vxpose.xlu0.b32.cont [9/16] %v341, 128
        %1043 = vxpose.xlu0.b32.cont [10/16] %v346, 128
        %1044 = vxpose.xlu0.b32.cont [11/16] %v351, 128
        %1045 = vxpose.xlu0.b32.cont [12/16] %v356, 128
        %1046 = vxpose.xlu0.b32.cont [13/16] %v361, 128
        %1047 = vxpose.xlu0.b32.cont [14/16] %v366, 128
        %1048 = vxpose.xlu0.b32.cont [15/16] %v371, 128
        %1049 = vxpose.xlu0.b32.end [16/16] %v376, 128
        %v1050 = vpop.trf.xlu0
        %v1051 = vpop.trf.xlu0
        %v1052 = vpop.trf.xlu0
        %v1053 = vpop.trf.xlu0
        %v1054 = vpop.trf.xlu0
        %v1055 = vpop.trf.xlu0
        %v1056 = vpop.trf.xlu0
        %v1057 = vpop.trf.xlu0
        %v1058 = vpop.trf.xlu0
        %v1059 = vpop.trf.xlu0
        %v1060 = vpop.trf.xlu0
        %v1061 = vpop.trf.xlu0
        %v1062 = vpop.trf.xlu0
        %v1063 = vpop.trf.xlu0
        %v1064 = vpop.trf.xlu0
        %v1065 = vpop.trf.xlu0
        %1066 = vxpose.xlu0.b32.start [1/16] %v302, 128
        %1067 = vxpose.xlu0.b32.cont [2/16] %v307, 128
        %1068 = vxpose.xlu0.b32.cont [3/16] %v312, 128
        %1069 = vxpose.xlu0.b32.cont [4/16] %v317, 128
        %1070 = vxpose.xlu0.b32.cont [5/16] %v322, 128
        %1071 = vxpose.xlu0.b32.cont [6/16] %v327, 128
        %1072 = vxpose.xlu0.b32.cont [7/16] %v332, 128
        %1073 = vxpose.xlu0.b32.cont [8/16] %v337, 128
        %1074 = vxpose.xlu0.b32.cont [9/16] %v342, 128
        %1075 = vxpose.xlu0.b32.cont [10/16] %v347, 128
        %1076 = vxpose.xlu0.b32.cont [11/16] %v352, 128
        %1077 = vxpose.xlu0.b32.cont [12/16] %v357, 128
        %1078 = vxpose.xlu0.b32.cont [13/16] %v362, 128
        %1079 = vxpose.xlu0.b32.cont [14/16] %v367, 128
        %1080 = vxpose.xlu0.b32.cont [15/16] %v372, 128
        %1081 = vxpose.xlu0.b32.end [16/16] %v377, 128
        %v1082 = vpop.trf.xlu0
        %v1083 = vpop.trf.xlu0
        %v1084 = vpop.trf.xlu0
        %v1085 = vpop.trf.xlu0
        %v1086 = vpop.trf.xlu0
        %v1087 = vpop.trf.xlu0
        %v1088 = vpop.trf.xlu0
        %v1089 = vpop.trf.xlu0
        %v1090 = vpop.trf.xlu0
        %v1091 = vpop.trf.xlu0
        %v1092 = vpop.trf.xlu0
        %v1093 = vpop.trf.xlu0
        %v1094 = vpop.trf.xlu0
        %v1095 = vpop.trf.xlu0
        %v1096 = vpop.trf.xlu0
        %v1097 = vpop.trf.xlu0
        %1098 = vxpose.xlu0.b32.start [1/16] %v378, 128
        %1099 = vxpose.xlu0.b32.cont [2/16] %v383, 128
        %1100 = vxpose.xlu0.b32.cont [3/16] %v388, 128
        %1101 = vxpose.xlu0.b32.cont [4/16] %v393, 128
        %1102 = vxpose.xlu0.b32.cont [5/16] %v398, 128
        %1103 = vxpose.xlu0.b32.cont [6/16] %v403, 128
        %1104 = vxpose.xlu0.b32.cont [7/16] %v408, 128
        %1105 = vxpose.xlu0.b32.cont [8/16] %v413, 128
        %1106 = vxpose.xlu0.b32.cont [9/16] %v418, 128
        %1107 = vxpose.xlu0.b32.cont [10/16] %v423, 128
        %1108 = vxpose.xlu0.b32.cont [11/16] %v428, 128
        %1109 = vxpose.xlu0.b32.cont [12/16] %v433, 128
        %1110 = vxpose.xlu0.b32.cont [13/16] %v438, 128
        %1111 = vxpose.xlu0.b32.cont [14/16] %v443, 128
        %1112 = vxpose.xlu0.b32.cont [15/16] %v448, 128
        %1113 = vxpose.xlu0.b32.end [16/16] %v453, 128
        %v1114 = vpop.trf.xlu0
        %v1115 = vpop.trf.xlu0
        %v1116 = vpop.trf.xlu0
        %v1117 = vpop.trf.xlu0
        %v1118 = vpop.trf.xlu0
        %v1119 = vpop.trf.xlu0
        %v1120 = vpop.trf.xlu0
        %v1121 = vpop.trf.xlu0
        %v1122 = vpop.trf.xlu0
        %v1123 = vpop.trf.xlu0
        %v1124 = vpop.trf.xlu0
        %v1125 = vpop.trf.xlu0
        %v1126 = vpop.trf.xlu0
        %v1127 = vpop.trf.xlu0
        %v1128 = vpop.trf.xlu0
        %v1129 = vpop.trf.xlu0
        %1130 = vxpose.xlu0.b32.start [1/16] %v379, 128
        %1131 = vxpose.xlu0.b32.cont [2/16] %v384, 128
        %1132 = vxpose.xlu0.b32.cont [3/16] %v389, 128
        %1133 = vxpose.xlu0.b32.cont [4/16] %v394, 128
        %1134 = vxpose.xlu0.b32.cont [5/16] %v399, 128
        %1135 = vxpose.xlu0.b32.cont [6/16] %v404, 128
        %1136 = vxpose.xlu0.b32.cont [7/16] %v409, 128
        %1137 = vxpose.xlu0.b32.cont [8/16] %v414, 128
        %1138 = vxpose.xlu0.b32.cont [9/16] %v419, 128
        %1139 = vxpose.xlu0.b32.cont [10/16] %v424, 128
        %1140 = vxpose.xlu0.b32.cont [11/16] %v429, 128
        %1141 = vxpose.xlu0.b32.cont [12/16] %v434, 128
        %1142 = vxpose.xlu0.b32.cont [13/16] %v439, 128
        %1143 = vxpose.xlu0.b32.cont [14/16] %v444, 128
        %1144 = vxpose.xlu0.b32.cont [15/16] %v449, 128
        %1145 = vxpose.xlu0.b32.end [16/16] %v454, 128
        %v1146 = vpop.trf.xlu0
        %v1147 = vpop.trf.xlu0
        %v1148 = vpop.trf.xlu0
        %v1149 = vpop.trf.xlu0
        %v1150 = vpop.trf.xlu0
        %v1151 = vpop.trf.xlu0
        %v1152 = vpop.trf.xlu0
        %v1153 = vpop.trf.xlu0
        %v1154 = vpop.trf.xlu0
        %v1155 = vpop.trf.xlu0
        %v1156 = vpop.trf.xlu0
        %v1157 = vpop.trf.xlu0
        %v1158 = vpop.trf.xlu0
        %v1159 = vpop.trf.xlu0
        %v1160 = vpop.trf.xlu0
        %v1161 = vpop.trf.xlu0
        %1162 = vxpose.xlu0.b32.start [1/16] %v380, 128
        %1163 = vxpose.xlu0.b32.cont [2/16] %v385, 128
        %1164 = vxpose.xlu0.b32.cont [3/16] %v390, 128
        %1165 = vxpose.xlu0.b32.cont [4/16] %v395, 128
        %1166 = vxpose.xlu0.b32.cont [5/16] %v400, 128
        %1167 = vxpose.xlu0.b32.cont [6/16] %v405, 128
        %1168 = vxpose.xlu0.b32.cont [7/16] %v410, 128
        %1169 = vxpose.xlu0.b32.cont [8/16] %v415, 128
        %1170 = vxpose.xlu0.b32.cont [9/16] %v420, 128
        %1171 = vxpose.xlu0.b32.cont [10/16] %v425, 128
        %1172 = vxpose.xlu0.b32.cont [11/16] %v430, 128
        %1173 = vxpose.xlu0.b32.cont [12/16] %v435, 128
        %1174 = vxpose.xlu0.b32.cont [13/16] %v440, 128
        %1175 = vxpose.xlu0.b32.cont [14/16] %v445, 128
        %1176 = vxpose.xlu0.b32.cont [15/16] %v450, 128
        %1177 = vxpose.xlu0.b32.end [16/16] %v455, 128
        %v1178 = vpop.trf.xlu0
        %v1179 = vpop.trf.xlu0
        %v1180 = vpop.trf.xlu0
        %v1181 = vpop.trf.xlu0
        %v1182 = vpop.trf.xlu0
        %v1183 = vpop.trf.xlu0
        %v1184 = vpop.trf.xlu0
        %v1185 = vpop.trf.xlu0
        %v1186 = vpop.trf.xlu0
        %v1187 = vpop.trf.xlu0
        %v1188 = vpop.trf.xlu0
        %v1189 = vpop.trf.xlu0
        %v1190 = vpop.trf.xlu0
        %v1191 = vpop.trf.xlu0
        %v1192 = vpop.trf.xlu0
        %v1193 = vpop.trf.xlu0
        %1194 = vxpose.xlu0.b32.start [1/16] %v381, 128
        %1195 = vxpose.xlu0.b32.cont [2/16] %v386, 128
        %1196 = vxpose.xlu0.b32.cont [3/16] %v391, 128
        %1197 = vxpose.xlu0.b32.cont [4/16] %v396, 128
        %1198 = vxpose.xlu0.b32.cont [5/16] %v401, 128
        %1199 = vxpose.xlu0.b32.cont [6/16] %v406, 128
        %1200 = vxpose.xlu0.b32.cont [7/16] %v411, 128
        %1201 = vxpose.xlu0.b32.cont [8/16] %v416, 128
        %1202 = vxpose.xlu0.b32.cont [9/16] %v421, 128
        %1203 = vxpose.xlu0.b32.cont [10/16] %v426, 128
        %1204 = vxpose.xlu0.b32.cont [11/16] %v431, 128
        %1205 = vxpose.xlu0.b32.cont [12/16] %v436, 128
        %1206 = vxpose.xlu0.b32.cont [13/16] %v441, 128
        %1207 = vxpose.xlu0.b32.cont [14/16] %v446, 128
        %1208 = vxpose.xlu0.b32.cont [15/16] %v451, 128
        %1209 = vxpose.xlu0.b32.end [16/16] %v456, 128
        %v1210 = vpop.trf.xlu0
        %v1211 = vpop.trf.xlu0
        %v1212 = vpop.trf.xlu0
        %v1213 = vpop.trf.xlu0
        %v1214 = vpop.trf.xlu0
        %v1215 = vpop.trf.xlu0
        %v1216 = vpop.trf.xlu0
        %v1217 = vpop.trf.xlu0
        %v1218 = vpop.trf.xlu0
        %v1219 = vpop.trf.xlu0
        %v1220 = vpop.trf.xlu0
        %v1221 = vpop.trf.xlu0
        %v1222 = vpop.trf.xlu0
        %v1223 = vpop.trf.xlu0
        %v1224 = vpop.trf.xlu0
        %v1225 = vpop.trf.xlu0
        %1226 = vxpose.xlu0.b32.start [1/16] %v382, 128
        %1227 = vxpose.xlu0.b32.cont [2/16] %v387, 128
        %1228 = vxpose.xlu0.b32.cont [3/16] %v392, 128
        %1229 = vxpose.xlu0.b32.cont [4/16] %v397, 128
        %1230 = vxpose.xlu0.b32.cont [5/16] %v402, 128
        %1231 = vxpose.xlu0.b32.cont [6/16] %v407, 128
        %1232 = vxpose.xlu0.b32.cont [7/16] %v412, 128
        %1233 = vxpose.xlu0.b32.cont [8/16] %v417, 128
        %1234 = vxpose.xlu0.b32.cont [9/16] %v422, 128
        %1235 = vxpose.xlu0.b32.cont [10/16] %v427, 128
        %1236 = vxpose.xlu0.b32.cont [11/16] %v432, 128
        %1237 = vxpose.xlu0.b32.cont [12/16] %v437, 128
        %1238 = vxpose.xlu0.b32.cont [13/16] %v442, 128
        %1239 = vxpose.xlu0.b32.cont [14/16] %v447, 128
        %1240 = vxpose.xlu0.b32.cont [15/16] %v452, 128
        %1241 = vxpose.xlu0.b32.end [16/16] %v457, 128
        %v1242 = vpop.trf.xlu0
        %v1243 = vpop.trf.xlu0
        %v1244 = vpop.trf.xlu0
        %v1245 = vpop.trf.xlu0
        %v1246 = vpop.trf.xlu0
        %v1247 = vpop.trf.xlu0
        %v1248 = vpop.trf.xlu0
        %v1249 = vpop.trf.xlu0
        %v1250 = vpop.trf.xlu0
        %v1251 = vpop.trf.xlu0
        %v1252 = vpop.trf.xlu0
        %v1253 = vpop.trf.xlu0
        %v1254 = vpop.trf.xlu0
        %v1255 = vpop.trf.xlu0
        %v1256 = vpop.trf.xlu0
        %v1257 = vpop.trf.xlu0
        %1258 = vxpose.xlu0.b32.start [1/16] %v458, 128
        %1259 = vxpose.xlu0.b32.cont [2/16] %v463, 128
        %1260 = vxpose.xlu0.b32.cont [3/16] %v468, 128
        %1261 = vxpose.xlu0.b32.cont [4/16] %v473, 128
        %1262 = vxpose.xlu0.b32.cont [5/16] %v478, 128
        %1263 = vxpose.xlu0.b32.cont [6/16] %v483, 128
        %1264 = vxpose.xlu0.b32.cont [7/16] %v488, 128
        %1265 = vxpose.xlu0.b32.cont [8/16] %v493, 128
        %1266 = vxpose.xlu0.b32.cont [9/16] %v498, 128
        %1267 = vxpose.xlu0.b32.cont [10/16] %v503, 128
        %1268 = vxpose.xlu0.b32.cont [11/16] %v508, 128
        %1269 = vxpose.xlu0.b32.cont [12/16] %v513, 128
        %1270 = vxpose.xlu0.b32.cont [13/16] %v518, 128
        %1271 = vxpose.xlu0.b32.cont [14/16] %v523, 128
        %1272 = vxpose.xlu0.b32.cont [15/16] %v528, 128
        %1273 = vxpose.xlu0.b32.end [16/16] %v533, 128
        %v1274 = vpop.trf.xlu0
        %v1275 = vpop.trf.xlu0
        %v1276 = vpop.trf.xlu0
        %v1277 = vpop.trf.xlu0
        %v1278 = vpop.trf.xlu0
        %v1279 = vpop.trf.xlu0
        %v1280 = vpop.trf.xlu0
        %v1281 = vpop.trf.xlu0
        %v1282 = vpop.trf.xlu0
        %v1283 = vpop.trf.xlu0
        %v1284 = vpop.trf.xlu0
        %v1285 = vpop.trf.xlu0
        %v1286 = vpop.trf.xlu0
        %v1287 = vpop.trf.xlu0
        %v1288 = vpop.trf.xlu0
        %v1289 = vpop.trf.xlu0
        %1290 = vxpose.xlu0.b32.start [1/16] %v459, 128
        %1291 = vxpose.xlu0.b32.cont [2/16] %v464, 128
        %1292 = vxpose.xlu0.b32.cont [3/16] %v469, 128
        %1293 = vxpose.xlu0.b32.cont [4/16] %v474, 128
        %1294 = vxpose.xlu0.b32.cont [5/16] %v479, 128
        %1295 = vxpose.xlu0.b32.cont [6/16] %v484, 128
        %1296 = vxpose.xlu0.b32.cont [7/16] %v489, 128
        %1297 = vxpose.xlu0.b32.cont [8/16] %v494, 128
        %1298 = vxpose.xlu0.b32.cont [9/16] %v499, 128
        %1299 = vxpose.xlu0.b32.cont [10/16] %v504, 128
        %1300 = vxpose.xlu0.b32.cont [11/16] %v509, 128
        %1301 = vxpose.xlu0.b32.cont [12/16] %v514, 128
        %1302 = vxpose.xlu0.b32.cont [13/16] %v519, 128
        %1303 = vxpose.xlu0.b32.cont [14/16] %v524, 128
        %1304 = vxpose.xlu0.b32.cont [15/16] %v529, 128
        %1305 = vxpose.xlu0.b32.end [16/16] %v534, 128
        %v1306 = vpop.trf.xlu0
        %v1307 = vpop.trf.xlu0
        %v1308 = vpop.trf.xlu0
        %v1309 = vpop.trf.xlu0
        %v1310 = vpop.trf.xlu0
        %v1311 = vpop.trf.xlu0
        %v1312 = vpop.trf.xlu0
        %v1313 = vpop.trf.xlu0
        %v1314 = vpop.trf.xlu0
        %v1315 = vpop.trf.xlu0
        %v1316 = vpop.trf.xlu0
        %v1317 = vpop.trf.xlu0
        %v1318 = vpop.trf.xlu0
        %v1319 = vpop.trf.xlu0
        %v1320 = vpop.trf.xlu0
        %v1321 = vpop.trf.xlu0
        %1322 = vxpose.xlu0.b32.start [1/16] %v460, 128
        %1323 = vxpose.xlu0.b32.cont [2/16] %v465, 128
        %1324 = vxpose.xlu0.b32.cont [3/16] %v470, 128
        %1325 = vxpose.xlu0.b32.cont [4/16] %v475, 128
        %1326 = vxpose.xlu0.b32.cont [5/16] %v480, 128
        %1327 = vxpose.xlu0.b32.cont [6/16] %v485, 128
        %1328 = vxpose.xlu0.b32.cont [7/16] %v490, 128
        %1329 = vxpose.xlu0.b32.cont [8/16] %v495, 128
        %1330 = vxpose.xlu0.b32.cont [9/16] %v500, 128
        %1331 = vxpose.xlu0.b32.cont [10/16] %v505, 128
        %1332 = vxpose.xlu0.b32.cont [11/16] %v510, 128
        %1333 = vxpose.xlu0.b32.cont [12/16] %v515, 128
        %1334 = vxpose.xlu0.b32.cont [13/16] %v520, 128
        %1335 = vxpose.xlu0.b32.cont [14/16] %v525, 128
        %1336 = vxpose.xlu0.b32.cont [15/16] %v530, 128
        %1337 = vxpose.xlu0.b32.end [16/16] %v535, 128
        %v1338 = vpop.trf.xlu0
        %v1339 = vpop.trf.xlu0
        %v1340 = vpop.trf.xlu0
        %v1341 = vpop.trf.xlu0
        %v1342 = vpop.trf.xlu0
        %v1343 = vpop.trf.xlu0
        %v1344 = vpop.trf.xlu0
        %v1345 = vpop.trf.xlu0
        %v1346 = vpop.trf.xlu0
        %v1347 = vpop.trf.xlu0
        %v1348 = vpop.trf.xlu0
        %v1349 = vpop.trf.xlu0
        %v1350 = vpop.trf.xlu0
        %v1351 = vpop.trf.xlu0
        %v1352 = vpop.trf.xlu0
        %v1353 = vpop.trf.xlu0
        %1354 = vxpose.xlu0.b32.start [1/16] %v461, 128
        %1355 = vxpose.xlu0.b32.cont [2/16] %v466, 128
        %1356 = vxpose.xlu0.b32.cont [3/16] %v471, 128
        %1357 = vxpose.xlu0.b32.cont [4/16] %v476, 128
        %1358 = vxpose.xlu0.b32.cont [5/16] %v481, 128
        %1359 = vxpose.xlu0.b32.cont [6/16] %v486, 128
        %1360 = vxpose.xlu0.b32.cont [7/16] %v491, 128
        %1361 = vxpose.xlu0.b32.cont [8/16] %v496, 128
        %1362 = vxpose.xlu0.b32.cont [9/16] %v501, 128
        %1363 = vxpose.xlu0.b32.cont [10/16] %v506, 128
        %1364 = vxpose.xlu0.b32.cont [11/16] %v511, 128
        %1365 = vxpose.xlu0.b32.cont [12/16] %v516, 128
        %1366 = vxpose.xlu0.b32.cont [13/16] %v521, 128
        %1367 = vxpose.xlu0.b32.cont [14/16] %v526, 128
        %1368 = vxpose.xlu0.b32.cont [15/16] %v531, 128
        %1369 = vxpose.xlu0.b32.end [16/16] %v536, 128
        %v1370 = vpop.trf.xlu0
        %v1371 = vpop.trf.xlu0
        %v1372 = vpop.trf.xlu0
        %v1373 = vpop.trf.xlu0
        %v1374 = vpop.trf.xlu0
        %v1375 = vpop.trf.xlu0
        %v1376 = vpop.trf.xlu0
        %v1377 = vpop.trf.xlu0
        %v1378 = vpop.trf.xlu0
        %v1379 = vpop.trf.xlu0
        %v1380 = vpop.trf.xlu0
        %v1381 = vpop.trf.xlu0
        %v1382 = vpop.trf.xlu0
        %v1383 = vpop.trf.xlu0
        %v1384 = vpop.trf.xlu0
        %v1385 = vpop.trf.xlu0
        %1386 = vxpose.xlu0.b32.start [1/16] %v462, 128
        %1387 = vxpose.xlu0.b32.cont [2/16] %v467, 128
        %1388 = vxpose.xlu0.b32.cont [3/16] %v472, 128
        %1389 = vxpose.xlu0.b32.cont [4/16] %v477, 128
        %1390 = vxpose.xlu0.b32.cont [5/16] %v482, 128
        %1391 = vxpose.xlu0.b32.cont [6/16] %v487, 128
        %1392 = vxpose.xlu0.b32.cont [7/16] %v492, 128
        %1393 = vxpose.xlu0.b32.cont [8/16] %v497, 128
        %1394 = vxpose.xlu0.b32.cont [9/16] %v502, 128
        %1395 = vxpose.xlu0.b32.cont [10/16] %v507, 128
        %1396 = vxpose.xlu0.b32.cont [11/16] %v512, 128
        %1397 = vxpose.xlu0.b32.cont [12/16] %v517, 128
        %1398 = vxpose.xlu0.b32.cont [13/16] %v522, 128
        %1399 = vxpose.xlu0.b32.cont [14/16] %v527, 128
        %1400 = vxpose.xlu0.b32.cont [15/16] %v532, 128
        %1401 = vxpose.xlu0.b32.end [16/16] %v537, 128
        %v1402 = vpop.trf.xlu0
        %v1403 = vpop.trf.xlu0
        %v1404 = vpop.trf.xlu0
        %v1405 = vpop.trf.xlu0
        %v1406 = vpop.trf.xlu0
        %v1407 = vpop.trf.xlu0
        %v1408 = vpop.trf.xlu0
        %v1409 = vpop.trf.xlu0
        %v1410 = vpop.trf.xlu0
        %v1411 = vpop.trf.xlu0
        %v1412 = vpop.trf.xlu0
        %v1413 = vpop.trf.xlu0
        %v1414 = vpop.trf.xlu0
        %v1415 = vpop.trf.xlu0
        %v1416 = vpop.trf.xlu0
        %v1417 = vpop.trf.xlu0
        %1418 = vxpose.xlu0.b32.start [1/16] %v538, 128
        %1419 = vxpose.xlu0.b32.cont [2/16] %v543, 128
        %1420 = vxpose.xlu0.b32.cont [3/16] %v548, 128
        %1421 = vxpose.xlu0.b32.cont [4/16] %v553, 128
        %1422 = vxpose.xlu0.b32.cont [5/16] %v558, 128
        %1423 = vxpose.xlu0.b32.cont [6/16] %v563, 128
        %1424 = vxpose.xlu0.b32.cont [7/16] %v568, 128
        %1425 = vxpose.xlu0.b32.cont [8/16] %v573, 128
        %1426 = vxpose.xlu0.b32.cont [9/16] %v578, 128
        %1427 = vxpose.xlu0.b32.cont [10/16] %v583, 128
        %1428 = vxpose.xlu0.b32.cont [11/16] %v588, 128
        %1429 = vxpose.xlu0.b32.cont [12/16] %v593, 128
        %1430 = vxpose.xlu0.b32.cont [13/16] %v598, 128
        %1431 = vxpose.xlu0.b32.cont [14/16] %v603, 128
        %1432 = vxpose.xlu0.b32.cont [15/16] %v608, 128
        %1433 = vxpose.xlu0.b32.end [16/16] %v613, 128
        %v1434 = vpop.trf.xlu0
        %v1435 = vpop.trf.xlu0
        %v1436 = vpop.trf.xlu0
        %v1437 = vpop.trf.xlu0
        %v1438 = vpop.trf.xlu0
        %v1439 = vpop.trf.xlu0
        %v1440 = vpop.trf.xlu0
        %v1441 = vpop.trf.xlu0
        %v1442 = vpop.trf.xlu0
        %v1443 = vpop.trf.xlu0
        %v1444 = vpop.trf.xlu0
        %v1445 = vpop.trf.xlu0
        %v1446 = vpop.trf.xlu0
        %v1447 = vpop.trf.xlu0
        %v1448 = vpop.trf.xlu0
        %v1449 = vpop.trf.xlu0
        %1450 = vxpose.xlu0.b32.start [1/16] %v539, 128
        %1451 = vxpose.xlu0.b32.cont [2/16] %v544, 128
        %1452 = vxpose.xlu0.b32.cont [3/16] %v549, 128
        %1453 = vxpose.xlu0.b32.cont [4/16] %v554, 128
        %1454 = vxpose.xlu0.b32.cont [5/16] %v559, 128
        %1455 = vxpose.xlu0.b32.cont [6/16] %v564, 128
        %1456 = vxpose.xlu0.b32.cont [7/16] %v569, 128
        %1457 = vxpose.xlu0.b32.cont [8/16] %v574, 128
        %1458 = vxpose.xlu0.b32.cont [9/16] %v579, 128
        %1459 = vxpose.xlu0.b32.cont [10/16] %v584, 128
        %1460 = vxpose.xlu0.b32.cont [11/16] %v589, 128
        %1461 = vxpose.xlu0.b32.cont [12/16] %v594, 128
        %1462 = vxpose.xlu0.b32.cont [13/16] %v599, 128
        %1463 = vxpose.xlu0.b32.cont [14/16] %v604, 128
        %1464 = vxpose.xlu0.b32.cont [15/16] %v609, 128
        %1465 = vxpose.xlu0.b32.end [16/16] %v614, 128
        %v1466 = vpop.trf.xlu0
        %v1467 = vpop.trf.xlu0
        %v1468 = vpop.trf.xlu0
        %v1469 = vpop.trf.xlu0
        %v1470 = vpop.trf.xlu0
        %v1471 = vpop.trf.xlu0
        %v1472 = vpop.trf.xlu0
        %v1473 = vpop.trf.xlu0
        %v1474 = vpop.trf.xlu0
        %v1475 = vpop.trf.xlu0
        %v1476 = vpop.trf.xlu0
        %v1477 = vpop.trf.xlu0
        %v1478 = vpop.trf.xlu0
        %v1479 = vpop.trf.xlu0
        %v1480 = vpop.trf.xlu0
        %v1481 = vpop.trf.xlu0
        %1482 = vxpose.xlu0.b32.start [1/16] %v540, 128
        %1483 = vxpose.xlu0.b32.cont [2/16] %v545, 128
        %1484 = vxpose.xlu0.b32.cont [3/16] %v550, 128
        %1485 = vxpose.xlu0.b32.cont [4/16] %v555, 128
        %1486 = vxpose.xlu0.b32.cont [5/16] %v560, 128
        %1487 = vxpose.xlu0.b32.cont [6/16] %v565, 128
        %1488 = vxpose.xlu0.b32.cont [7/16] %v570, 128
        %1489 = vxpose.xlu0.b32.cont [8/16] %v575, 128
        %1490 = vxpose.xlu0.b32.cont [9/16] %v580, 128
        %1491 = vxpose.xlu0.b32.cont [10/16] %v585, 128
        %1492 = vxpose.xlu0.b32.cont [11/16] %v590, 128
        %1493 = vxpose.xlu0.b32.cont [12/16] %v595, 128
        %1494 = vxpose.xlu0.b32.cont [13/16] %v600, 128
        %1495 = vxpose.xlu0.b32.cont [14/16] %v605, 128
        %1496 = vxpose.xlu0.b32.cont [15/16] %v610, 128
        %1497 = vxpose.xlu0.b32.end [16/16] %v615, 128
        %v1498 = vpop.trf.xlu0
        %v1499 = vpop.trf.xlu0
        %v1500 = vpop.trf.xlu0
        %v1501 = vpop.trf.xlu0
        %v1502 = vpop.trf.xlu0
        %v1503 = vpop.trf.xlu0
        %v1504 = vpop.trf.xlu0
        %v1505 = vpop.trf.xlu0
        %v1506 = vpop.trf.xlu0
        %v1507 = vpop.trf.xlu0
        %v1508 = vpop.trf.xlu0
        %v1509 = vpop.trf.xlu0
        %v1510 = vpop.trf.xlu0
        %v1511 = vpop.trf.xlu0
        %v1512 = vpop.trf.xlu0
        %v1513 = vpop.trf.xlu0
        %1514 = vxpose.xlu0.b32.start [1/16] %v541, 128
        %1515 = vxpose.xlu0.b32.cont [2/16] %v546, 128
        %1516 = vxpose.xlu0.b32.cont [3/16] %v551, 128
        %1517 = vxpose.xlu0.b32.cont [4/16] %v556, 128
        %1518 = vxpose.xlu0.b32.cont [5/16] %v561, 128
        %1519 = vxpose.xlu0.b32.cont [6/16] %v566, 128
        %1520 = vxpose.xlu0.b32.cont [7/16] %v571, 128
        %1521 = vxpose.xlu0.b32.cont [8/16] %v576, 128
        %1522 = vxpose.xlu0.b32.cont [9/16] %v581, 128
        %1523 = vxpose.xlu0.b32.cont [10/16] %v586, 128
        %1524 = vxpose.xlu0.b32.cont [11/16] %v591, 128
        %1525 = vxpose.xlu0.b32.cont [12/16] %v596, 128
        %1526 = vxpose.xlu0.b32.cont [13/16] %v601, 128
        %1527 = vxpose.xlu0.b32.cont [14/16] %v606, 128
        %1528 = vxpose.xlu0.b32.cont [15/16] %v611, 128
        %1529 = vxpose.xlu0.b32.end [16/16] %v616, 128
        %v1530 = vpop.trf.xlu0
        %v1531 = vpop.trf.xlu0
        %v1532 = vpop.trf.xlu0
        %v1533 = vpop.trf.xlu0
        %v1534 = vpop.trf.xlu0
        %v1535 = vpop.trf.xlu0
        %v1536 = vpop.trf.xlu0
        %v1537 = vpop.trf.xlu0
        %v1538 = vpop.trf.xlu0
        %v1539 = vpop.trf.xlu0
        %v1540 = vpop.trf.xlu0
        %v1541 = vpop.trf.xlu0
        %v1542 = vpop.trf.xlu0
        %v1543 = vpop.trf.xlu0
        %v1544 = vpop.trf.xlu0
        %v1545 = vpop.trf.xlu0
        %1546 = vxpose.xlu0.b32.start [1/16] %v542, 128
        %1547 = vxpose.xlu0.b32.cont [2/16] %v547, 128
        %1548 = vxpose.xlu0.b32.cont [3/16] %v552, 128
        %1549 = vxpose.xlu0.b32.cont [4/16] %v557, 128
        %1550 = vxpose.xlu0.b32.cont [5/16] %v562, 128
        %1551 = vxpose.xlu0.b32.cont [6/16] %v567, 128
        %1552 = vxpose.xlu0.b32.cont [7/16] %v572, 128
        %1553 = vxpose.xlu0.b32.cont [8/16] %v577, 128
        %1554 = vxpose.xlu0.b32.cont [9/16] %v582, 128
        %1555 = vxpose.xlu0.b32.cont [10/16] %v587, 128
        %1556 = vxpose.xlu0.b32.cont [11/16] %v592, 128
        %1557 = vxpose.xlu0.b32.cont [12/16] %v597, 128
        %1558 = vxpose.xlu0.b32.cont [13/16] %v602, 128
        %1559 = vxpose.xlu0.b32.cont [14/16] %v607, 128
        %1560 = vxpose.xlu0.b32.cont [15/16] %v612, 128
        %1561 = vxpose.xlu0.b32.end [16/16] %v617, 128
        %v1562 = vpop.trf.xlu0
        %v1563 = vpop.trf.xlu0
        %v1564 = vpop.trf.xlu0
        %v1565 = vpop.trf.xlu0
        %v1566 = vpop.trf.xlu0
        %v1567 = vpop.trf.xlu0
        %v1568 = vpop.trf.xlu0
        %v1569 = vpop.trf.xlu0
        %v1570 = vpop.trf.xlu0
        %v1571 = vpop.trf.xlu0
        %v1572 = vpop.trf.xlu0
        %v1573 = vpop.trf.xlu0
        %v1574 = vpop.trf.xlu0
        %v1575 = vpop.trf.xlu0
        %v1576 = vpop.trf.xlu0
        %v1577 = vpop.trf.xlu0
        %1578 = vst [vmem:[%s135] sm:$0xff] %v634
        %1579 = vst [vmem:[%s135 + $0x8] sm:$0xff] %v794
        %1580 = vst [vmem:[%s135 + $0x10] sm:$0xff] %v954
        %1581 = vst [vmem:[%s135 + $0x18] sm:$0xff] %v635
        %1582 = vst [vmem:[%s135 + $0x20] sm:$0xff] %v795
        %1583 = vst [vmem:[%s135 + $0x28] sm:$0xff] %v955
        %1584 = vst [vmem:[%s135 + $0x30] sm:$0xff] %v636
        %1585 = vst [vmem:[%s135 + $0x38] sm:$0xff] %v796
        %1586 = vst [vmem:[%s135 + $0x40] sm:$0xff] %v956
        %1587 = vst [vmem:[%s135 + $0x48] sm:$0xff] %v637
        %1588 = vst [vmem:[%s135 + $0x50] sm:$0xff] %v797
        %1589 = vst [vmem:[%s135 + $0x58] sm:$0xff] %v957
        %1590 = vst [vmem:[%s135 + $0x60] sm:$0xff] %v638
        %1591 = vst [vmem:[%s135 + $0x68] sm:$0xff] %v798
        %1592 = vst [vmem:[%s135 + $0x70] sm:$0xff] %v958
        %1593 = vst [vmem:[%s135 + $0x78] sm:$0xff] %v639
        %1594 = vst [vmem:[%s135 + $0x80] sm:$0xff] %v799
        %1595 = vst [vmem:[%s135 + $0x88] sm:$0xff] %v959
        %1596 = vst [vmem:[%s135 + $0x90] sm:$0xff] %v640
        %1597 = vst [vmem:[%s135 + $0x98] sm:$0xff] %v800
        %1598 = vst [vmem:[%s135 + $0xa0] sm:$0xff] %v960
        %1599 = vst [vmem:[%s135 + $0xa8] sm:$0xff] %v641
        %1600 = vst [vmem:[%s135 + $0xb0] sm:$0xff] %v801
        %1601 = vst [vmem:[%s135 + $0xb8] sm:$0xff] %v961
        %1602 = vst [vmem:[%s135 + $0xc0] sm:$0xff] %v642
        %1603 = vst [vmem:[%s135 + $0xc8] sm:$0xff] %v802
        %1604 = vst [vmem:[%s135 + $0xd0] sm:$0xff] %v962
        %1605 = vst [vmem:[%s135 + $0xd8] sm:$0xff] %v643
        %1606 = vst [vmem:[%s135 + $0xe0] sm:$0xff] %v803
        %1607 = vst [vmem:[%s135 + $0xe8] sm:$0xff] %v963
        %1608 = vst [vmem:[%s135 + $0xf0] sm:$0xff] %v644
        %1609 = vst [vmem:[%s135 + $0xf8] sm:$0xff] %v804
        %1610 = vst [vmem:[%s135 + $0x100] sm:$0xff] %v964
        %1611 = vst [vmem:[%s135 + $0x108] sm:$0xff] %v645
        %1612 = vst [vmem:[%s135 + $0x110] sm:$0xff] %v805
        %1613 = vst [vmem:[%s135 + $0x118] sm:$0xff] %v965
        %1614 = vst [vmem:[%s135 + $0x120] sm:$0xff] %v646
        %1615 = vst [vmem:[%s135 + $0x128] sm:$0xff] %v806
        %1616 = vst [vmem:[%s135 + $0x130] sm:$0xff] %v966
        %1617 = vst [vmem:[%s135 + $0x138] sm:$0xff] %v647
        %1618 = vst [vmem:[%s135 + $0x140] sm:$0xff] %v807
        %1619 = vst [vmem:[%s135 + $0x148] sm:$0xff] %v967
        %1620 = vst [vmem:[%s135 + $0x150] sm:$0xff] %v648
        %1621 = vst [vmem:[%s135 + $0x158] sm:$0xff] %v808
        %1622 = vst [vmem:[%s135 + $0x160] sm:$0xff] %v968
        %1623 = vst [vmem:[%s135 + $0x168] sm:$0xff] %v649
        %1624 = vst [vmem:[%s135 + $0x170] sm:$0xff] %v809
        %1625 = vst [vmem:[%s135 + $0x178] sm:$0xff] %v969
        %1626 = vst [vmem:[%s135 + $0x180] sm:$0xff] %v666
        %1627 = vst [vmem:[%s135 + $0x188] sm:$0xff] %v826
        %1628 = vst [vmem:[%s135 + $0x190] sm:$0xff] %v986
        %1629 = vst [vmem:[%s135 + $0x198] sm:$0xff] %v667
        %1630 = vst [vmem:[%s135 + $0x1a0] sm:$0xff] %v827
        %1631 = vst [vmem:[%s135 + $0x1a8] sm:$0xff] %v987
        %1632 = vst [vmem:[%s135 + $0x1b0] sm:$0xff] %v668
        %1633 = vst [vmem:[%s135 + $0x1b8] sm:$0xff] %v828
        %1634 = vst [vmem:[%s135 + $0x1c0] sm:$0xff] %v988
        %1635 = vst [vmem:[%s135 + $0x1c8] sm:$0xff] %v669
        %1636 = vst [vmem:[%s135 + $0x1d0] sm:$0xff] %v829
        %1637 = vst [vmem:[%s135 + $0x1d8] sm:$0xff] %v989
        %1638 = vst [vmem:[%s135 + $0x1e0] sm:$0xff] %v670
        %1639 = vst [vmem:[%s135 + $0x1e8] sm:$0xff] %v830
        %1640 = vst [vmem:[%s135 + $0x1f0] sm:$0xff] %v990
        %1641 = vst [vmem:[%s135 + $0x1f8] sm:$0xff] %v671
        %1642 = vst [vmem:[%s135 + $0x200] sm:$0xff] %v831
        %1643 = vst [vmem:[%s135 + $0x208] sm:$0xff] %v991
        %1644 = vst [vmem:[%s135 + $0x210] sm:$0xff] %v672
        %1645 = vst [vmem:[%s135 + $0x218] sm:$0xff] %v832
        %1646 = vst [vmem:[%s135 + $0x220] sm:$0xff] %v992
        %1647 = vst [vmem:[%s135 + $0x228] sm:$0xff] %v673
        %1648 = vst [vmem:[%s135 + $0x230] sm:$0xff] %v833
        %1649 = vst [vmem:[%s135 + $0x238] sm:$0xff] %v993
        %1650 = vst [vmem:[%s135 + $0x240] sm:$0xff] %v674
        %1651 = vst [vmem:[%s135 + $0x248] sm:$0xff] %v834
        %1652 = vst [vmem:[%s135 + $0x250] sm:$0xff] %v994
        %1653 = vst [vmem:[%s135 + $0x258] sm:$0xff] %v675
        %1654 = vst [vmem:[%s135 + $0x260] sm:$0xff] %v835
        %1655 = vst [vmem:[%s135 + $0x268] sm:$0xff] %v995
        %1656 = vst [vmem:[%s135 + $0x270] sm:$0xff] %v676
        %1657 = vst [vmem:[%s135 + $0x278] sm:$0xff] %v836
        %1658 = vst [vmem:[%s135 + $0x280] sm:$0xff] %v996
        %1659 = vst [vmem:[%s135 + $0x288] sm:$0xff] %v677
        %1660 = vst [vmem:[%s135 + $0x290] sm:$0xff] %v837
        %1661 = vst [vmem:[%s135 + $0x298] sm:$0xff] %v997
        %1662 = vst [vmem:[%s135 + $0x2a0] sm:$0xff] %v678
        %1663 = vst [vmem:[%s135 + $0x2a8] sm:$0xff] %v838
        %1664 = vst [vmem:[%s135 + $0x2b0] sm:$0xff] %v998
        %1665 = vst [vmem:[%s135 + $0x2b8] sm:$0xff] %v679
        %1666 = vst [vmem:[%s135 + $0x2c0] sm:$0xff] %v839
        %1667 = vst [vmem:[%s135 + $0x2c8] sm:$0xff] %v999
        %1668 = vst [vmem:[%s135 + $0x2d0] sm:$0xff] %v680
        %1669 = vst [vmem:[%s135 + $0x2d8] sm:$0xff] %v840
        %1670 = vst [vmem:[%s135 + $0x2e0] sm:$0xff] %v1000
        %1671 = vst [vmem:[%s135 + $0x2e8] sm:$0xff] %v681
        %1672 = vst [vmem:[%s135 + $0x2f0] sm:$0xff] %v841
        %1673 = vst [vmem:[%s135 + $0x2f8] sm:$0xff] %v1001
        %1674 = vst [vmem:[%s135 + $0x300] sm:$0xff] %v698
        %1675 = vst [vmem:[%s135 + $0x308] sm:$0xff] %v858
        %1676 = vst [vmem:[%s135 + $0x310] sm:$0xff] %v1018
        %1677 = vst [vmem:[%s135 + $0x318] sm:$0xff] %v699
        %1678 = vst [vmem:[%s135 + $0x320] sm:$0xff] %v859
        %1679 = vst [vmem:[%s135 + $0x328] sm:$0xff] %v1019
        %1680 = vst [vmem:[%s135 + $0x330] sm:$0xff] %v700
        %1681 = vst [vmem:[%s135 + $0x338] sm:$0xff] %v860
        %1682 = vst [vmem:[%s135 + $0x340] sm:$0xff] %v1020
        %1683 = vst [vmem:[%s135 + $0x348] sm:$0xff] %v701
        %1684 = vst [vmem:[%s135 + $0x350] sm:$0xff] %v861
        %1685 = vst [vmem:[%s135 + $0x358] sm:$0xff] %v1021
        %1686 = vst [vmem:[%s135 + $0x360] sm:$0xff] %v702
        %1687 = vst [vmem:[%s135 + $0x368] sm:$0xff] %v862
        %1688 = vst [vmem:[%s135 + $0x370] sm:$0xff] %v1022
        %1689 = vst [vmem:[%s135 + $0x378] sm:$0xff] %v703
        %1690 = vst [vmem:[%s135 + $0x380] sm:$0xff] %v863
        %1691 = vst [vmem:[%s135 + $0x388] sm:$0xff] %v1023
        %1692 = vst [vmem:[%s135 + $0x390] sm:$0xff] %v704
        %1693 = vst [vmem:[%s135 + $0x398] sm:$0xff] %v864
        %1694 = vst [vmem:[%s135 + $0x3a0] sm:$0xff] %v1024
        %1695 = vst [vmem:[%s135 + $0x3a8] sm:$0xff] %v705
        %1696 = vst [vmem:[%s135 + $0x3b0] sm:$0xff] %v865
        %1697 = vst [vmem:[%s135 + $0x3b8] sm:$0xff] %v1025
        %1698 = vst [vmem:[%s135 + $0x3c0] sm:$0xff] %v706
        %1699 = vst [vmem:[%s135 + $0x3c8] sm:$0xff] %v866
        %1700 = vst [vmem:[%s135 + $0x3d0] sm:$0xff] %v1026
        %1701 = vst [vmem:[%s135 + $0x3d8] sm:$0xff] %v707
        %1702 = vst [vmem:[%s135 + $0x3e0] sm:$0xff] %v867
        %1703 = vst [vmem:[%s135 + $0x3e8] sm:$0xff] %v1027
        %1704 = vst [vmem:[%s135 + $0x3f0] sm:$0xff] %v708
        %1705 = vst [vmem:[%s135 + $0x3f8] sm:$0xff] %v868
        %1706 = vst [vmem:[%s135 + $0x400] sm:$0xff] %v1028
        %1707 = vst [vmem:[%s135 + $0x408] sm:$0xff] %v709
        %1708 = vst [vmem:[%s135 + $0x410] sm:$0xff] %v869
        %1709 = vst [vmem:[%s135 + $0x418] sm:$0xff] %v1029
        %1710 = vst [vmem:[%s135 + $0x420] sm:$0xff] %v710
        %1711 = vst [vmem:[%s135 + $0x428] sm:$0xff] %v870
        %1712 = vst [vmem:[%s135 + $0x430] sm:$0xff] %v1030
        %1713 = vst [vmem:[%s135 + $0x438] sm:$0xff] %v711
        %1714 = vst [vmem:[%s135 + $0x440] sm:$0xff] %v871
        %1715 = vst [vmem:[%s135 + $0x448] sm:$0xff] %v1031
        %1716 = vst [vmem:[%s135 + $0x450] sm:$0xff] %v712
        %1717 = vst [vmem:[%s135 + $0x458] sm:$0xff] %v872
        %1718 = vst [vmem:[%s135 + $0x460] sm:$0xff] %v1032
        %1719 = vst [vmem:[%s135 + $0x468] sm:$0xff] %v713
        %1720 = vst [vmem:[%s135 + $0x470] sm:$0xff] %v873
        %1721 = vst [vmem:[%s135 + $0x478] sm:$0xff] %v1033
        %1722 = vst [vmem:[%s135 + $0x480] sm:$0xff] %v730
        %1723 = vst [vmem:[%s135 + $0x488] sm:$0xff] %v890
        %1724 = vst [vmem:[%s135 + $0x490] sm:$0xff] %v1050
        %1725 = vst [vmem:[%s135 + $0x498] sm:$0xff] %v731
        %1726 = vst [vmem:[%s135 + $0x4a0] sm:$0xff] %v891
        %1727 = vst [vmem:[%s135 + $0x4a8] sm:$0xff] %v1051
        %1728 = vst [vmem:[%s135 + $0x4b0] sm:$0xff] %v732
        %1729 = vst [vmem:[%s135 + $0x4b8] sm:$0xff] %v892
        %1730 = vst [vmem:[%s135 + $0x4c0] sm:$0xff] %v1052
        %1731 = vst [vmem:[%s135 + $0x4c8] sm:$0xff] %v733
        %1732 = vst [vmem:[%s135 + $0x4d0] sm:$0xff] %v893
        %1733 = vst [vmem:[%s135 + $0x4d8] sm:$0xff] %v1053
        %1734 = vst [vmem:[%s135 + $0x4e0] sm:$0xff] %v734
        %1735 = vst [vmem:[%s135 + $0x4e8] sm:$0xff] %v894
        %1736 = vst [vmem:[%s135 + $0x4f0] sm:$0xff] %v1054
        %1737 = vst [vmem:[%s135 + $0x4f8] sm:$0xff] %v735
        %1738 = vst [vmem:[%s135 + $0x500] sm:$0xff] %v895
        %1739 = vst [vmem:[%s135 + $0x508] sm:$0xff] %v1055
        %1740 = vst [vmem:[%s135 + $0x510] sm:$0xff] %v736
        %1741 = vst [vmem:[%s135 + $0x518] sm:$0xff] %v896
        %1742 = vst [vmem:[%s135 + $0x520] sm:$0xff] %v1056
        %1743 = vst [vmem:[%s135 + $0x528] sm:$0xff] %v737
        %1744 = vst [vmem:[%s135 + $0x530] sm:$0xff] %v897
        %1745 = vst [vmem:[%s135 + $0x538] sm:$0xff] %v1057
        %1746 = vst [vmem:[%s135 + $0x540] sm:$0xff] %v738
        %1747 = vst [vmem:[%s135 + $0x548] sm:$0xff] %v898
        %1748 = vst [vmem:[%s135 + $0x550] sm:$0xff] %v1058
        %1749 = vst [vmem:[%s135 + $0x558] sm:$0xff] %v739
        %1750 = vst [vmem:[%s135 + $0x560] sm:$0xff] %v899
        %1751 = vst [vmem:[%s135 + $0x568] sm:$0xff] %v1059
        %1752 = vst [vmem:[%s135 + $0x570] sm:$0xff] %v740
        %1753 = vst [vmem:[%s135 + $0x578] sm:$0xff] %v900
        %1754 = vst [vmem:[%s135 + $0x580] sm:$0xff] %v1060
        %1755 = vst [vmem:[%s135 + $0x588] sm:$0xff] %v741
        %1756 = vst [vmem:[%s135 + $0x590] sm:$0xff] %v901
        %1757 = vst [vmem:[%s135 + $0x598] sm:$0xff] %v1061
        %1758 = vst [vmem:[%s135 + $0x5a0] sm:$0xff] %v742
        %1759 = vst [vmem:[%s135 + $0x5a8] sm:$0xff] %v902
        %1760 = vst [vmem:[%s135 + $0x5b0] sm:$0xff] %v1062
        %1761 = vst [vmem:[%s135 + $0x5b8] sm:$0xff] %v743
        %1762 = vst [vmem:[%s135 + $0x5c0] sm:$0xff] %v903
        %1763 = vst [vmem:[%s135 + $0x5c8] sm:$0xff] %v1063
        %1764 = vst [vmem:[%s135 + $0x5d0] sm:$0xff] %v744
        %1765 = vst [vmem:[%s135 + $0x5d8] sm:$0xff] %v904
        %1766 = vst [vmem:[%s135 + $0x5e0] sm:$0xff] %v1064
        %1767 = vst [vmem:[%s135 + $0x5e8] sm:$0xff] %v745
        %1768 = vst [vmem:[%s135 + $0x5f0] sm:$0xff] %v905
        %1769 = vst [vmem:[%s135 + $0x5f8] sm:$0xff] %v1065
        %1770 = vst [vmem:[%s135 + $0x600] sm:$0xff] %v762
        %1771 = vst [vmem:[%s135 + $0x608] sm:$0xff] %v922
        %1772 = vst [vmem:[%s135 + $0x610] sm:$0xff] %v1082
        %1773 = vst [vmem:[%s135 + $0x618] sm:$0xff] %v1114
        %1774 = vst [vmem:[%s135 + $0x620] sm:$0xff] %v1274
        %1775 = vst [vmem:[%s135 + $0x628] sm:$0xff] %v1434
        %1776 = vst [vmem:[%s135 + $0x630] sm:$0xff] %v1115
        %1777 = vst [vmem:[%s135 + $0x638] sm:$0xff] %v1275
        %1778 = vst [vmem:[%s135 + $0x640] sm:$0xff] %v1435
        %1779 = vst [vmem:[%s135 + $0x648] sm:$0xff] %v1116
        %1780 = vst [vmem:[%s135 + $0x650] sm:$0xff] %v1276
        %1781 = vst [vmem:[%s135 + $0x658] sm:$0xff] %v1436
        %1782 = vst [vmem:[%s135 + $0x660] sm:$0xff] %v1117
        %1783 = vst [vmem:[%s135 + $0x668] sm:$0xff] %v1277
        %1784 = vst [vmem:[%s135 + $0x670] sm:$0xff] %v1437
        %1785 = vst [vmem:[%s135 + $0x678] sm:$0xff] %v1118
        %1786 = vst [vmem:[%s135 + $0x680] sm:$0xff] %v1278
        %1787 = vst [vmem:[%s135 + $0x688] sm:$0xff] %v1438
        %1788 = vst [vmem:[%s135 + $0x690] sm:$0xff] %v1119
        %1789 = vst [vmem:[%s135 + $0x698] sm:$0xff] %v1279
        %1790 = vst [vmem:[%s135 + $0x6a0] sm:$0xff] %v1439
        %1791 = vst [vmem:[%s135 + $0x6a8] sm:$0xff] %v1120
        %1792 = vst [vmem:[%s135 + $0x6b0] sm:$0xff] %v1280
        %1793 = vst [vmem:[%s135 + $0x6b8] sm:$0xff] %v1440
        %1794 = vst [vmem:[%s135 + $0x6c0] sm:$0xff] %v1121
        %1795 = vst [vmem:[%s135 + $0x6c8] sm:$0xff] %v1281
        %1796 = vst [vmem:[%s135 + $0x6d0] sm:$0xff] %v1441
        %1797 = vst [vmem:[%s135 + $0x6d8] sm:$0xff] %v1122
        %1798 = vst [vmem:[%s135 + $0x6e0] sm:$0xff] %v1282
        %1799 = vst [vmem:[%s135 + $0x6e8] sm:$0xff] %v1442
        %1800 = vst [vmem:[%s135 + $0x6f0] sm:$0xff] %v1123
        %1801 = vst [vmem:[%s135 + $0x6f8] sm:$0xff] %v1283
        %1802 = vst [vmem:[%s135 + $0x700] sm:$0xff] %v1443
        %1803 = vst [vmem:[%s135 + $0x708] sm:$0xff] %v1124
        %1804 = vst [vmem:[%s135 + $0x710] sm:$0xff] %v1284
        %1805 = vst [vmem:[%s135 + $0x718] sm:$0xff] %v1444
        %1806 = vst [vmem:[%s135 + $0x720] sm:$0xff] %v1125
        %1807 = vst [vmem:[%s135 + $0x728] sm:$0xff] %v1285
        %1808 = vst [vmem:[%s135 + $0x730] sm:$0xff] %v1445
        %1809 = vst [vmem:[%s135 + $0x738] sm:$0xff] %v1126
        %1810 = vst [vmem:[%s135 + $0x740] sm:$0xff] %v1286
        %1811 = vst [vmem:[%s135 + $0x748] sm:$0xff] %v1446
        %1812 = vst [vmem:[%s135 + $0x750] sm:$0xff] %v1127
        %1813 = vst [vmem:[%s135 + $0x758] sm:$0xff] %v1287
        %1814 = vst [vmem:[%s135 + $0x760] sm:$0xff] %v1447
        %1815 = vst [vmem:[%s135 + $0x768] sm:$0xff] %v1128
        %1816 = vst [vmem:[%s135 + $0x770] sm:$0xff] %v1288
        %1817 = vst [vmem:[%s135 + $0x778] sm:$0xff] %v1448
        %1818 = vst [vmem:[%s135 + $0x780] sm:$0xff] %v1129
        %1819 = vst [vmem:[%s135 + $0x788] sm:$0xff] %v1289
        %1820 = vst [vmem:[%s135 + $0x790] sm:$0xff] %v1449
        %1821 = vst [vmem:[%s135 + $0x798] sm:$0xff] %v1146
        %1822 = vst [vmem:[%s135 + $0x7a0] sm:$0xff] %v1306
        %1823 = vst [vmem:[%s135 + $0x7a8] sm:$0xff] %v1466
        %1824 = vst [vmem:[%s135 + $0x7b0] sm:$0xff] %v1147
        %1825 = vst [vmem:[%s135 + $0x7b8] sm:$0xff] %v1307
        %1826 = vst [vmem:[%s135 + $0x7c0] sm:$0xff] %v1467
        %1827 = vst [vmem:[%s135 + $0x7c8] sm:$0xff] %v1148
        %1828 = vst [vmem:[%s135 + $0x7d0] sm:$0xff] %v1308
        %1829 = vst [vmem:[%s135 + $0x7d8] sm:$0xff] %v1468
        %1830 = vst [vmem:[%s135 + $0x7e0] sm:$0xff] %v1149
        %1831 = vst [vmem:[%s135 + $0x7e8] sm:$0xff] %v1309
        %1832 = vst [vmem:[%s135 + $0x7f0] sm:$0xff] %v1469
        %1833 = vst [vmem:[%s135 + $0x7f8] sm:$0xff] %v1150
        %1834 = vst [vmem:[%s135 + $0x800] sm:$0xff] %v1310
        %1835 = vst [vmem:[%s135 + $0x808] sm:$0xff] %v1470
        %1836 = vst [vmem:[%s135 + $0x810] sm:$0xff] %v1151
        %1837 = vst [vmem:[%s135 + $0x818] sm:$0xff] %v1311
        %1838 = vst [vmem:[%s135 + $0x820] sm:$0xff] %v1471
        %1839 = vst [vmem:[%s135 + $0x828] sm:$0xff] %v1152
        %1840 = vst [vmem:[%s135 + $0x830] sm:$0xff] %v1312
        %1841 = vst [vmem:[%s135 + $0x838] sm:$0xff] %v1472
        %1842 = vst [vmem:[%s135 + $0x840] sm:$0xff] %v1153
        %1843 = vst [vmem:[%s135 + $0x848] sm:$0xff] %v1313
        %1844 = vst [vmem:[%s135 + $0x850] sm:$0xff] %v1473
        %1845 = vst [vmem:[%s135 + $0x858] sm:$0xff] %v1154
        %1846 = vst [vmem:[%s135 + $0x860] sm:$0xff] %v1314
        %1847 = vst [vmem:[%s135 + $0x868] sm:$0xff] %v1474
        %1848 = vst [vmem:[%s135 + $0x870] sm:$0xff] %v1155
        %1849 = vst [vmem:[%s135 + $0x878] sm:$0xff] %v1315
        %1850 = vst [vmem:[%s135 + $0x880] sm:$0xff] %v1475
        %1851 = vst [vmem:[%s135 + $0x888] sm:$0xff] %v1156
        %1852 = vst [vmem:[%s135 + $0x890] sm:$0xff] %v1316
        %1853 = vst [vmem:[%s135 + $0x898] sm:$0xff] %v1476
        %1854 = vst [vmem:[%s135 + $0x8a0] sm:$0xff] %v1157
        %1855 = vst [vmem:[%s135 + $0x8a8] sm:$0xff] %v1317
        %1856 = vst [vmem:[%s135 + $0x8b0] sm:$0xff] %v1477
        %1857 = vst [vmem:[%s135 + $0x8b8] sm:$0xff] %v1158
        %1858 = vst [vmem:[%s135 + $0x8c0] sm:$0xff] %v1318
        %1859 = vst [vmem:[%s135 + $0x8c8] sm:$0xff] %v1478
        %1860 = vst [vmem:[%s135 + $0x8d0] sm:$0xff] %v1159
        %1861 = vst [vmem:[%s135 + $0x8d8] sm:$0xff] %v1319
        %1862 = vst [vmem:[%s135 + $0x8e0] sm:$0xff] %v1479
        %1863 = vst [vmem:[%s135 + $0x8e8] sm:$0xff] %v1160
        %1864 = vst [vmem:[%s135 + $0x8f0] sm:$0xff] %v1320
        %1865 = vst [vmem:[%s135 + $0x8f8] sm:$0xff] %v1480
        %1866 = vst [vmem:[%s135 + $0x900] sm:$0xff] %v1161
        %1867 = vst [vmem:[%s135 + $0x908] sm:$0xff] %v1321
        %1868 = vst [vmem:[%s135 + $0x910] sm:$0xff] %v1481
        %1869 = vst [vmem:[%s135 + $0x918] sm:$0xff] %v1178
        %1870 = vst [vmem:[%s135 + $0x920] sm:$0xff] %v1338
        %1871 = vst [vmem:[%s135 + $0x928] sm:$0xff] %v1498
        %1872 = vst [vmem:[%s135 + $0x930] sm:$0xff] %v1179
        %1873 = vst [vmem:[%s135 + $0x938] sm:$0xff] %v1339
        %1874 = vst [vmem:[%s135 + $0x940] sm:$0xff] %v1499
        %1875 = vst [vmem:[%s135 + $0x948] sm:$0xff] %v1180
        %1876 = vst [vmem:[%s135 + $0x950] sm:$0xff] %v1340
        %1877 = vst [vmem:[%s135 + $0x958] sm:$0xff] %v1500
        %1878 = vst [vmem:[%s135 + $0x960] sm:$0xff] %v1181
        %1879 = vst [vmem:[%s135 + $0x968] sm:$0xff] %v1341
        %1880 = vst [vmem:[%s135 + $0x970] sm:$0xff] %v1501
        %1881 = vst [vmem:[%s135 + $0x978] sm:$0xff] %v1182
        %1882 = vst [vmem:[%s135 + $0x980] sm:$0xff] %v1342
        %1883 = vst [vmem:[%s135 + $0x988] sm:$0xff] %v1502
        %1884 = vst [vmem:[%s135 + $0x990] sm:$0xff] %v1183
        %1885 = vst [vmem:[%s135 + $0x998] sm:$0xff] %v1343
        %1886 = vst [vmem:[%s135 + $0x9a0] sm:$0xff] %v1503
        %1887 = vst [vmem:[%s135 + $0x9a8] sm:$0xff] %v1184
        %1888 = vst [vmem:[%s135 + $0x9b0] sm:$0xff] %v1344
        %1889 = vst [vmem:[%s135 + $0x9b8] sm:$0xff] %v1504
        %1890 = vst [vmem:[%s135 + $0x9c0] sm:$0xff] %v1185
        %1891 = vst [vmem:[%s135 + $0x9c8] sm:$0xff] %v1345
        %1892 = vst [vmem:[%s135 + $0x9d0] sm:$0xff] %v1505
        %1893 = vst [vmem:[%s135 + $0x9d8] sm:$0xff] %v1186
        %1894 = vst [vmem:[%s135 + $0x9e0] sm:$0xff] %v1346
        %1895 = vst [vmem:[%s135 + $0x9e8] sm:$0xff] %v1506
        %1896 = vst [vmem:[%s135 + $0x9f0] sm:$0xff] %v1187
        %1897 = vst [vmem:[%s135 + $0x9f8] sm:$0xff] %v1347
        %1898 = vst [vmem:[%s135 + $0xa00] sm:$0xff] %v1507
        %1899 = vst [vmem:[%s135 + $0xa08] sm:$0xff] %v1188
        %1900 = vst [vmem:[%s135 + $0xa10] sm:$0xff] %v1348
        %1901 = vst [vmem:[%s135 + $0xa18] sm:$0xff] %v1508
        %1902 = vst [vmem:[%s135 + $0xa20] sm:$0xff] %v1189
        %1903 = vst [vmem:[%s135 + $0xa28] sm:$0xff] %v1349
        %1904 = vst [vmem:[%s135 + $0xa30] sm:$0xff] %v1509
        %1905 = vst [vmem:[%s135 + $0xa38] sm:$0xff] %v1190
        %1906 = vst [vmem:[%s135 + $0xa40] sm:$0xff] %v1350
        %1907 = vst [vmem:[%s135 + $0xa48] sm:$0xff] %v1510
        %1908 = vst [vmem:[%s135 + $0xa50] sm:$0xff] %v1191
        %1909 = vst [vmem:[%s135 + $0xa58] sm:$0xff] %v1351
        %1910 = vst [vmem:[%s135 + $0xa60] sm:$0xff] %v1511
        %1911 = vst [vmem:[%s135 + $0xa68] sm:$0xff] %v1192
        %1912 = vst [vmem:[%s135 + $0xa70] sm:$0xff] %v1352
        %1913 = vst [vmem:[%s135 + $0xa78] sm:$0xff] %v1512
        %1914 = vst [vmem:[%s135 + $0xa80] sm:$0xff] %v1193
        %1915 = vst [vmem:[%s135 + $0xa88] sm:$0xff] %v1353
        %1916 = vst [vmem:[%s135 + $0xa90] sm:$0xff] %v1513
        %1917 = vst [vmem:[%s135 + $0xa98] sm:$0xff] %v1210
        %1918 = vst [vmem:[%s135 + $0xaa0] sm:$0xff] %v1370
        %1919 = vst [vmem:[%s135 + $0xaa8] sm:$0xff] %v1530
        %1920 = vst [vmem:[%s135 + $0xab0] sm:$0xff] %v1211
        %1921 = vst [vmem:[%s135 + $0xab8] sm:$0xff] %v1371
        %1922 = vst [vmem:[%s135 + $0xac0] sm:$0xff] %v1531
        %1923 = vst [vmem:[%s135 + $0xac8] sm:$0xff] %v1212
        %1924 = vst [vmem:[%s135 + $0xad0] sm:$0xff] %v1372
        %1925 = vst [vmem:[%s135 + $0xad8] sm:$0xff] %v1532
        %1926 = vst [vmem:[%s135 + $0xae0] sm:$0xff] %v1213
        %1927 = vst [vmem:[%s135 + $0xae8] sm:$0xff] %v1373
        %1928 = vst [vmem:[%s135 + $0xaf0] sm:$0xff] %v1533
        %1929 = vst [vmem:[%s135 + $0xaf8] sm:$0xff] %v1214
        %1930 = vst [vmem:[%s135 + $0xb00] sm:$0xff] %v1374
        %1931 = vst [vmem:[%s135 + $0xb08] sm:$0xff] %v1534
        %1932 = vst [vmem:[%s135 + $0xb10] sm:$0xff] %v1215
        %1933 = vst [vmem:[%s135 + $0xb18] sm:$0xff] %v1375
        %1934 = vst [vmem:[%s135 + $0xb20] sm:$0xff] %v1535
        %1935 = vst [vmem:[%s135 + $0xb28] sm:$0xff] %v1216
        %1936 = vst [vmem:[%s135 + $0xb30] sm:$0xff] %v1376
        %1937 = vst [vmem:[%s135 + $0xb38] sm:$0xff] %v1536
        %1938 = vst [vmem:[%s135 + $0xb40] sm:$0xff] %v1217
        %1939 = vst [vmem:[%s135 + $0xb48] sm:$0xff] %v1377
        %1940 = vst [vmem:[%s135 + $0xb50] sm:$0xff] %v1537
        %1941 = vst [vmem:[%s135 + $0xb58] sm:$0xff] %v1218
        %1942 = vst [vmem:[%s135 + $0xb60] sm:$0xff] %v1378
        %1943 = vst [vmem:[%s135 + $0xb68] sm:$0xff] %v1538
        %1944 = vst [vmem:[%s135 + $0xb70] sm:$0xff] %v1219
        %1945 = vst [vmem:[%s135 + $0xb78] sm:$0xff] %v1379
        %1946 = vst [vmem:[%s135 + $0xb80] sm:$0xff] %v1539
        %1947 = vst [vmem:[%s135 + $0xb88] sm:$0xff] %v1220
        %1948 = vst [vmem:[%s135 + $0xb90] sm:$0xff] %v1380
        %1949 = vst [vmem:[%s135 + $0xb98] sm:$0xff] %v1540
        %1950 = vst [vmem:[%s135 + $0xba0] sm:$0xff] %v1221
        %1951 = vst [vmem:[%s135 + $0xba8] sm:$0xff] %v1381
        %1952 = vst [vmem:[%s135 + $0xbb0] sm:$0xff] %v1541
        %1953 = vst [vmem:[%s135 + $0xbb8] sm:$0xff] %v1222
        %1954 = vst [vmem:[%s135 + $0xbc0] sm:$0xff] %v1382
        %1955 = vst [vmem:[%s135 + $0xbc8] sm:$0xff] %v1542
        %1956 = vst [vmem:[%s135 + $0xbd0] sm:$0xff] %v1223
        %1957 = vst [vmem:[%s135 + $0xbd8] sm:$0xff] %v1383
        %1958 = vst [vmem:[%s135 + $0xbe0] sm:$0xff] %v1543
        %1959 = vst [vmem:[%s135 + $0xbe8] sm:$0xff] %v1224
        %1960 = vst [vmem:[%s135 + $0xbf0] sm:$0xff] %v1384
        %1961 = vst [vmem:[%s135 + $0xbf8] sm:$0xff] %v1544
        %1962 = vst [vmem:[%s135 + $0xc00] sm:$0xff] %v1225
        %1963 = vst [vmem:[%s135 + $0xc08] sm:$0xff] %v1385
        %1964 = vst [vmem:[%s135 + $0xc10] sm:$0xff] %v1545
        %1965 = vst [vmem:[%s135 + $0xc18] sm:$0xff] %v1242
        %1966 = vst [vmem:[%s135 + $0xc20] sm:$0xff] %v1402
        %1967 = vst [vmem:[%s135 + $0xc28] sm:$0xff] %v1562
        %s1968 = sand.u32 %s52, 1
        %s1969 = scalar_lea.sflag [#allocation4], %s1968
        %s1970 = sand.u32 %s52, 1
        %s1971 = smul.addr %s1970, 3120
        %s1972 = scalar_lea.vmem [#allocation5], %s1971
        // Predicated region
        $region29: #{tpu_custom_call.1} parent=23 // pred_check
          %p1973 = pneg %p62
        $region30: #{tpu_custom_call.1} parent=23 // pred_check_branch
          %1975 = sbr.rel (%p1973) target = $region32
        $region31: #{tpu_custom_call.1} parent=23 // pred_region
          %s1976 = smul.u32 2, %s18
          %s1978 = ssub.s32 49920, 49920
          %1979 = vsyncadd %s1969, %s1978
          %s1980 = smul.addr %s1976, 195
          %s1981 = smul.addr %s1980, 128
          %s1982 = scalar_lea.hbm %s1, %s1981
          %s1983 = sshll.u32 %s1972, 4
          %s1984 = int_to_ptr.vmem [resolvable:$true] %s1983
          %1989 = dma.vmem_to_hbm [thread:$0]  %s1984, 49920, %s1982, %s1969, 384, 384, 24
        $region32: #{tpu_custom_call.1} parent=23 // pred_fallthru
          _
      $region24: #{tpu_custom_call.1} parent=5 // pred_fallthru
        _
      %p1990 = scmp.le.s32.totalorder 2, %s13
      // Predicated region
      $region33: #{tpu_custom_call.1} parent=5 // pred_check
        %p1991 = pneg %p1990
      $region34: #{tpu_custom_call.1} parent=5 // pred_check_branch
        %1993 = sbr.rel (%p1991) target = $region36
      $region35: #{tpu_custom_call.1} parent=5 // pred_region
        %s1994 = ssub.s32 %s13, 2
        // Predicated region
        $region37: #{tpu_custom_call.1} parent=35 // pred_check
          %p1995 = pneg %p68
        $region38: #{tpu_custom_call.1} parent=35 // pred_check_branch
          %1997 = sbr.rel (%p1995) target = $region40
        $region39: #{tpu_custom_call.1} parent=35 // pred_region
          %s1998 = sand.u32 %s53, 1
          %s1999 = scalar_lea.sflag [#allocation4], %s1998
          %s2000 = sand.u32 %s53, 1
          %s2001 = smul.addr %s2000, 3120
          %s2002 = scalar_lea.vmem [#allocation5], %s2001
          %2003 = dma.done %s1999, 49920
        $region40: #{tpu_custom_call.1} parent=35 // pred_fallthru
          _
      $region36: #{tpu_custom_call.1} parent=5 // pred_fallthru
        _
    $region6: #{tpu_custom_call.1} parent=1 // loop_footer
      %s17 = sadd.s32 1, %s13
    $region7: #{tpu_custom_call.1} parent=1 // loop_footer_branch
      %12 = sbr.rel target = $region3
    $region8: #{tpu_custom_call.1} parent=1 // loop_exit
      _
    %2004 = vsyncpa [#allocation3], 1
    %s2005 = scalar_lea.sflag [#allocation3], 1
    %2006 = vsyncpa %s2005, 1
    %2007 = vsyncpa [#allocation4], 1
    %s2008 = scalar_lea.sflag [#allocation4], 1
    %2009 = vsyncpa %s2008, 1

</llo_original>
